<compile_context>
chip_gen: v7x
topology: tpu7x:2x2x1
jax: 0.10.0
libtpu: 0.0.40
codegen_flags: <defaults>
</compile_context>

<pallas_src>
import jax
import jax.numpy as jnp
from jax import lax
from jax.experimental import pallas as pl
from jax.experimental.pallas import tpu as pltpu

N_HEADS = 7
IN_DIM = 1024
OUT_DIM = 768
EPS = 1e-12  # F.normalize default eps


def _mean_proj_l2norm_kernel(x_ref, w_ref, b_ref, o_ref):
    """One batch tile: y = L2norm(x @ W_mean + b_mean, axis=-1)."""
    # x_ref: [bm, IN_DIM] bf16; w_ref: [IN_DIM, OUT_DIM] bf16;
    # b_ref: [1, OUT_DIM] f32; o_ref: [bm, OUT_DIM].
    acc = jnp.dot(x_ref[...], w_ref[...], preferred_element_type=jnp.float32)
    acc = acc + b_ref[...]                      # bias already head-averaged
    ss = jnp.sum(acc * acc, axis=-1, keepdims=True)
    # EUP rsqrt; sqrt is monotone so rsqrt(max(ss, eps^2)) == 1/max(||acc||, eps).
    inv = lax.rsqrt(jnp.maximum(ss, EPS * EPS))
    o_ref[...] = (acc * inv).astype(o_ref.dtype)


def prepare_params(w, b, *, weight_dtype=jnp.bfloat16):
    """One-time prep: collapse the 7 heads (mean commutes with Linear)."""
    w_mean = jnp.mean(w.astype(jnp.float32), axis=0).astype(weight_dtype)  # [1024, 768]
    b_mean = jnp.mean(b.astype(jnp.float32), axis=0).reshape(1, OUT_DIM)   # [1, 768] f32
    return w_mean, b_mean


def _choose_bm(B, block_m):
    """Batch tile: bf16 sublane multiple (16), >=2 grid steps when B allows."""
    if B <= 16:
        return 16                                 # single (possibly ragged) tile
    n_tiles = max(2, pl.cdiv(B, block_m))         # >=2 so both v7x TCs get work
    bm = -(-B // n_tiles)
    bm = ((bm + 15) // 16) * 16
    return min(bm, block_m)


def boost_audio_ib_mean_proj(x, w_mean, b_mean, *, block_m=512,
                             out_dtype=jnp.float32):
    """x: [B, 1024], w_mean: [1024, 768], b_mean: [1, 768] -> [B, 768]."""
    B = x.shape[0]
    # Stream x in the MXU input dtype (bf16 by default): half the HBM read
    # traffic; the downcast happens once here, not per-tile in VMEM.
    x = x.astype(w_mean.dtype)

    bm = _choose_bm(B, block_m)
    grid = (pl.cdiv(B, bm),)                      # ragged last block is masked

    return pl.pallas_call(
        _mean_proj_l2norm_kernel,
        out_shape=jax.ShapeDtypeStruct((B, OUT_DIM), out_dtype),
        grid=grid,
        in_specs=[
            pl.BlockSpec((bm, IN_DIM), lambda i: (i, 0)),
            pl.BlockSpec((IN_DIM, OUT_DIM), lambda i: (0, 0)),  # resident weights
            pl.BlockSpec((1, OUT_DIM), lambda i: (0, 0)),       # resident bias
        ],
        out_specs=pl.BlockSpec((bm, OUT_DIM), lambda i: (i, 0)),
        compiler_params=pltpu.CompilerParams(
            dimension_semantics=("parallel",),    # megacore sharding on v7x
            vmem_limit_bytes=48 * 1024 * 1024,    # within v7x 64 MiB physical VMEM
        ),
    )(x, w_mean, b_mean)


def boost_audio_ib(x, w, b, *, weight_dtype=jnp.bfloat16, block_m=512,
                   out_dtype=jnp.float32):
    """Full module semantics: x:[B,1024], w:[7,1024,768], b:[7,768] -> [B,768]."""
    w_mean, b_mean = prepare_params(w, b, weight_dtype=weight_dtype)
    return boost_audio_ib_mean_proj(x, w_mean, b_mean, block_m=block_m,
                                    out_dtype=out_dtype)


def reference(x, w, b):
    # Plain-JAX f32 reference matching the PyTorch per-head semantics.
    proj = jnp.einsum("bi,pio->pbo", x, w) + b[:, None, :]   # [7, B, 768]
    mean = jnp.mean(proj, axis=0)                            # [B, 768]
    norm = jnp.linalg.norm(mean, axis=-1, keepdims=True)
    return mean / jnp.maximum(norm, EPS)


if __name__ == "__main__":
    key = jax.random.PRNGKey(0)
    kx, kw, kb = jax.random.split(key, 3)

    # B=40 exercises both the multi-tile (parallel) path and the ragged last
    # block (no jnp.pad / slice copies in the wrapper).
    B = 40
    x = jax.random.normal(kx, (B, IN_DIM), dtype=jnp.float32)
    # Deterministic parameter init (Linear-like scale: 1/sqrt(fan_in)).
    bound = 1.0 / (IN_DIM ** 0.5)
    w = jax.random.uniform(kw, (N_HEADS, IN_DIM, OUT_DIM),
                           minval=-bound, maxval=bound, dtype=jnp.float32)
    b = jax.random.uniform(kb, (N_HEADS, OUT_DIM),
                           minval=-bound, maxval=bound, dtype=jnp.float32)

    out = boost_audio_ib(x, w, b)
    out = jax.block_until_ready(out)

    ref = reference(x, w, b)
    assert out.shape == (B, OUT_DIM)
    # bf16 x + bf16 weight streaming -> ~1e-3-level deviation vs f32 reference.
    max_diff = float(jnp.max(jnp.abs(out - ref)))
    assert jnp.allclose(out, ref, atol=5e-3, rtol=2e-2), (
        f"mismatch vs reference: max abs diff {max_diff}")

    print("KERNEL_OK")
</pallas_src>

<mosaic_0001>
module attributes {stable_mosaic.version = 11 : i64} {
  func.func @_mean_proj_l2norm_kernel(%arg0: i32, %arg1: memref<32x1024xbf16, #tpu.memory_space<vmem>>, %arg2: memref<1024x768xbf16, #tpu.memory_space<vmem>>, %arg3: memref<1x768xf32, #tpu.memory_space<vmem>>, %arg4: memref<32x768xf32, #tpu.memory_space<vmem>>) attributes {dimension_semantics = [#tpu.dimension_semantics<parallel>], iteration_bounds = array<i64: 2>, scalar_prefetch = 0 : i64, scratch_operands = 0 : i64, tpu.core_type = #tpu.core_type<tc>, window_params = [{transform_indices = @transform_0, window_bounds = array<i64: 32, 1024>}, {pipeline_mode = #tpu.pipeline_mode<synchronous>, transform_indices = @transform_1, window_bounds = array<i64: 1024, 768>}, {pipeline_mode = #tpu.pipeline_mode<synchronous>, transform_indices = @transform_2, window_bounds = array<i64: 1, 768>}, {transform_indices = @transform_3, window_bounds = array<i64: 32, 768>}]} {
    %c0 = arith.constant 0 : index
    %c0_0 = arith.constant 0 : index
    %0 = vector.load %arg1[%c0, %c0_0] : memref<32x1024xbf16, #tpu.memory_space<vmem>>, vector<32x1024xbf16>
    %c0_1 = arith.constant 0 : index
    %c0_2 = arith.constant 0 : index
    %1 = vector.load %arg2[%c0_1, %c0_2] : memref<1024x768xbf16, #tpu.memory_space<vmem>>, vector<1024x768xbf16>
    %cst = arith.constant dense<0.000000e+00> : vector<32x768xf32>
    %2 = tpu.matmul %0, %1, %cst {dimension_numbers = #tpu.dot_dimension_numbers<[1], [0], [0], [1], [0, 0, 1, 1], [], []>} : vector<32x1024xbf16>, vector<1024x768xbf16>, vector<32x768xf32> -> vector<32x768xf32>
    %c0_3 = arith.constant 0 : index
    %c0_4 = arith.constant 0 : index
    %3 = vector.load %arg3[%c0_3, %c0_4] : memref<1x768xf32, #tpu.memory_space<vmem>>, vector<1x768xf32>
    %4 = vector.broadcast %3 : vector<1x768xf32> to vector<32x768xf32>
    %5 = arith.addf %2, %4 : vector<32x768xf32>
    %6 = arith.mulf %5, %5 : vector<32x768xf32>
    %cst_5 = arith.constant dense<0.000000e+00> : vector<32xf32>
    %7 = vector.multi_reduction <add>, %6, %cst_5 [1] : vector<32x768xf32> to vector<32xf32>
    %8 = vector.shape_cast %7 : vector<32xf32> to vector<32x1xf32>
    %cst_6 = arith.constant 1.000000e-24 : f32
    %9 = vector.broadcast %cst_6 : f32 to vector<32x1xf32>
    %10 = arith.maximumf %8, %9 : vector<32x1xf32>
    %11 = math.rsqrt %10 : vector<32x1xf32>
    %12 = vector.broadcast %11 : vector<32x1xf32> to vector<32x768xf32>
    %13 = arith.mulf %5, %12 : vector<32x768xf32>
    %c0_7 = arith.constant 0 : index
    %c0_8 = arith.constant 0 : index
    %14 = vector.load %arg4[%c0_7, %c0_8] : memref<32x768xf32, #tpu.memory_space<vmem>>, vector<32x768xf32>
    tpu.vector_store %arg4[%c0_7, %c0_8], %13 {strides = array<i32>} : memref<32x768xf32, #tpu.memory_space<vmem>>, vector<32x768xf32>,
    return
  }
  func.func @transform_0(%arg0: i32) -> (i32, i32) {
    %c0_i32 = arith.constant 0 : i32
    %c0_i32_0 = arith.constant 0 : i32
    return %arg0, %c0_i32 : i32, i32
  }
  func.func @transform_1(%arg0: i32) -> (i32, i32) {
    %c0_i32 = arith.constant 0 : i32
    %c0_i32_0 = arith.constant 0 : i32
    %c0_i32_1 = arith.constant 0 : i32
    return %c0_i32, %c0_i32_0 : i32, i32
  }
  func.func @transform_2(%arg0: i32) -> (i32, i32) {
    %c0_i32 = arith.constant 0 : i32
    %c0_i32_0 = arith.constant 0 : i32
    %c0_i32_1 = arith.constant 0 : i32
    return %c0_i32, %c0_i32_0 : i32, i32
  }
  func.func @transform_3(%arg0: i32) -> (i32, i32) {
    %c0_i32 = arith.constant 0 : i32
    %c0_i32_0 = arith.constant 0 : i32
    return %arg0, %c0_i32 : i32, i32
  }
}

</mosaic_0001>

<llo_original>
// kernel: tpu_custom_call.1
$region0: #{tpu_custom_call.1}
  #allocation0 [shape = 'u32[]', space=smem, size = 0x4, offset = 0x4, fixed_abs, tag = 'smem constant byte address 0x4 - core index']
  #allocation1 [shape = 'u32[144,128]{1,0:T(1,128)}', space=vmem, size = 0x12000, scoped, tag = 'internal scratch']
  %s0 = inlined_call_operand.hbm [shape: bf16[40,1024], index: 0, kind: input, shape index: {}]
  %s1 = inlined_call_operand.hbm [shape: bf16[1024,768], index: 1, kind: input, shape index: {}]
  %s2 = inlined_call_operand.hbm [shape: f32[1,768], index: 2, kind: input, shape index: {}]
  %s3 = inlined_call_operand.hbm [shape: f32[40,768], index: 3, kind: output, shape index: {}]
  %s4 = sld [smem:[#allocation0]]
  $region57: #{tpu_custom_call.1} parent=0
    _
  %s6 = ssub.s32 1, %s4
  %s7 = scalar_select 0, %s6, %s4
  $region1: #{tpu_custom_call.1} parent=0
    #allocation2 [shape = 'u8[131072]{0}', space=vmem, size = 0x20000, scoped, tag = 'input window, operand 0']
    #allocation3 [shape = 's32[2]{0}', space=sflag, size = 0x8, scoped, tag = 'scoped memory for tpu_custom_call.1']
    #allocation4 [shape = 's32[2]{0}', space=sflag, size = 0x8, scoped, tag = 'scoped memory for tpu_custom_call.1']
    #allocation5 [shape = 'u8[1572864]{0}', space=vmem, size = 0x180000, scoped, tag = 'input window, operand 1, single buffered']
    #allocation6 [shape = 's32[1]{0}', space=sflag, size = 0x4, scoped, tag = 'scoped memory for tpu_custom_call.1']
    #allocation7 [shape = 'u8[3072]{0}', space=vmem, size = 0xc00, scoped, tag = 'input window, operand 2, single buffered']
    #allocation8 [shape = 'u8[196608]{0}', space=vmem, size = 0x30000, scoped, tag = 'output window, operand 0']
    %8 = vsyncpa [#allocation3], 0
    %s9 = scalar_lea.sflag [#allocation3], 1
    %10 = vsyncpa %s9, 0
    %11 = vsyncpa [#allocation6], 0
    %12 = vsyncpa [#allocation4], 0
    %s13 = scalar_lea.sflag [#allocation4], 1
    %14 = vsyncpa %s13, 0
    loop: start=0, step=1, limit=4
    $region2: #{tpu_custom_call.1} parent=1 // loop_pre_header
      _
    $region3: #{tpu_custom_call.1} parent=1 // loop_header
      %s16 = sphi 0, %s20
      %p17 = scmp.ge.s32.totalorder %s16, 4
      %s26 = sphi 0, %s28
      %s29 = sphi 0, %s26
      %s30 = sphi 0, %s29
      %s46 = sphi 0, %s30
      %s50 = sphi 0, %s50
      %s52 = sphi 0, %s50
      %s53 = sphi 0, %s52
      %s67 = sphi 0, %s53
      %s71 = sphi 0, %s71
      %s73 = sphi 0, %s71
      %s74 = sphi 0, %s73
      %s88 = sphi 0, %s74
      %s94 = sphi 0, %s96
      %s97 = sphi 0, %s94
      %s98 = sphi 0, %s97
      %s114 = sphi 0, %s98
    $region4: #{tpu_custom_call.1} parent=1 // loop_header_branch
      %19 = sbr.rel (%p17) target = $region8
    $region5: #{tpu_custom_call.1} parent=1 // loop_body
      %s21 = ssub.s32 %s16, 1
      %s22 = ssub.s32 %s16, 2
      %s23 = sadd.s32 %s16, 1
      %s24 = ssub.s32 %s16, %s23
      %p25 = scmp.eq.s32.totalorder %s24, 0
      %s27 = sadd.s32 %s26, 1
      %s28 = scalar_select %p25, %s26, %s27
      %p31 = pneg %p25
      %p32 = scmp.eq.s32.totalorder %s16, 1
      %p33 = por %p31, %p32
      %p34 = scmp.ne.s32.totalorder %s26, %s29
      %p35 = scmp.eq.s32.totalorder %s16, 0
      %p36 = por %p34, %p35
      %p37 = scmp.ne.s32.totalorder %s26, %s29
      %p38 = scmp.eq.s32.totalorder %s21, 1
      %p39 = por %p37, %p38
      %p40 = scmp.ne.s32.totalorder %s29, %s30
      %p41 = scmp.eq.s32.totalorder %s21, 0
      %p42 = por %p40, %p41
      %p43 = scmp.ne.s32.totalorder %s29, %s30
      %p44 = scmp.eq.s32.totalorder %s22, 1
      %p45 = por %p43, %p44
      %p47 = scmp.ne.s32.totalorder %s30, %s46
      %p48 = scmp.eq.s32.totalorder %s22, 0
      %p49 = por %p47, %p48
      %s51 = sadd.s32 %s50, 1
      %p54 = scmp.eq.s32.totalorder %s16, 1
      %p55 = scmp.ne.s32.totalorder %s50, %s52
      %p56 = scmp.eq.s32.totalorder %s16, 0
      %p57 = por %p55, %p56
      %p58 = scmp.ne.s32.totalorder %s50, %s52
      %p59 = scmp.eq.s32.totalorder %s21, 1
      %p60 = por %p58, %p59
      %p61 = scmp.ne.s32.totalorder %s52, %s53
      %p62 = scmp.eq.s32.totalorder %s21, 0
      %p63 = por %p61, %p62
      %p64 = scmp.ne.s32.totalorder %s52, %s53
      %p65 = scmp.eq.s32.totalorder %s22, 1
      %p66 = por %p64, %p65
      %p68 = scmp.ne.s32.totalorder %s53, %s67
      %p69 = scmp.eq.s32.totalorder %s22, 0
      %p70 = por %p68, %p69
      %s72 = sadd.s32 %s71, 1
      %p75 = scmp.eq.s32.totalorder %s16, 1
      %p76 = scmp.ne.s32.totalorder %s71, %s73
      %p77 = scmp.eq.s32.totalorder %s16, 0
      %p78 = por %p76, %p77
      %p79 = scmp.ne.s32.totalorder %s71, %s73
      %p80 = scmp.eq.s32.totalorder %s21, 1
      %p81 = por %p79, %p80
      %p82 = scmp.ne.s32.totalorder %s73, %s74
      %p83 = scmp.eq.s32.totalorder %s21, 0
      %p84 = por %p82, %p83
      %p85 = scmp.ne.s32.totalorder %s73, %s74
      %p86 = scmp.eq.s32.totalorder %s22, 1
      %p87 = por %p85, %p86
      %p89 = scmp.ne.s32.totalorder %s74, %s88
      %p90 = scmp.eq.s32.totalorder %s22, 0
      %p91 = por %p89, %p90
      %s92 = ssub.s32 %s16, %s23
      %p93 = scmp.eq.s32.totalorder %s92, 0
      %s95 = sadd.s32 %s94, 1
      %s96 = scalar_select %p93, %s94, %s95
      %p99 = pneg %p93
      %p100 = scmp.eq.s32.totalorder %s16, 1
      %p101 = por %p99, %p100
      %p102 = scmp.ne.s32.totalorder %s94, %s97
      %p103 = scmp.eq.s32.totalorder %s16, 0
      %p104 = por %p102, %p103
      %p105 = scmp.ne.s32.totalorder %s94, %s97
      %p106 = scmp.eq.s32.totalorder %s21, 1
      %p107 = por %p105, %p106
      %p108 = scmp.ne.s32.totalorder %s97, %s98
      %p109 = scmp.eq.s32.totalorder %s21, 0
      %p110 = por %p108, %p109
      %p111 = scmp.ne.s32.totalorder %s97, %s98
      %p112 = scmp.eq.s32.totalorder %s22, 1
      %p113 = por %p111, %p112
      %p115 = scmp.ne.s32.totalorder %s98, %s114
      %p116 = scmp.eq.s32.totalorder %s22, 0
      %p117 = por %p115, %p116
      %p118 = scmp.le.s32.totalorder 1, %s16
      %p119 = scmp.lt.s32.totalorder %s16, 3
      %p120 = pnand %p118, %p119
      %p121 = pneg %p120
      // Predicated region
      $region9: #{tpu_custom_call.1} parent=5 // pred_check
        _
      $region10: #{tpu_custom_call.1} parent=5 // pred_check_branch
        %123 = sbr.rel (%p120) target = $region12
      $region11: #{tpu_custom_call.1} parent=5 // pred_region
        %s124 = ssub.s32 %s16, 1
        // Predicated region
        $region13: #{tpu_custom_call.1} parent=11 // pred_check
          %p125 = pneg %p63
        $region14: #{tpu_custom_call.1} parent=11 // pred_check_branch
          %127 = sbr.rel (%p125) target = $region16
        $region15: #{tpu_custom_call.1} parent=11 // pred_region
          %s129 = ssub.s32 49152, 49152
          %130 = vsyncadd [#allocation6], %s129
          %s131 = sshll.u32 [#allocation5], 4
          %s132 = int_to_ptr.vmem [resolvable:$true] %s131
          %137 = dma.hbm_to_vmem [thread:$0]  %s1, 49152, %s132, [#allocation6], 384, 384, 24
        $region16: #{tpu_custom_call.1} parent=11 // pred_fallthru
          _
        // Predicated region
        $region17: #{tpu_custom_call.1} parent=11 // pred_check
          %p138 = pneg %p84
        $region18: #{tpu_custom_call.1} parent=11 // pred_check_branch
          %140 = sbr.rel (%p138) target = $region20
        $region19: #{tpu_custom_call.1} parent=11 // pred_region
          %s142 = ssub.s32 96, 96
          %143 = vsyncadd [#allocation6], %s142
          %s145 = sshll.u32 [#allocation7], 4
          %s146 = int_to_ptr.vmem [resolvable:$true] %s145
          %148 = dma.hbm_to_vmem [thread:$0]  %s2, 96, %s146, [#allocation6]
        $region20: #{tpu_custom_call.1} parent=11 // pred_fallthru
          _
      $region12: #{tpu_custom_call.1} parent=5 // pred_fallthru
        _
      %p149 = scmp.lt.s32.totalorder %s16, 2
      // Predicated region
      $region21: #{tpu_custom_call.1} parent=5 // pred_check
        %p150 = pneg %p149
      $region22: #{tpu_custom_call.1} parent=5 // pred_check_branch
        %152 = sbr.rel (%p150) target = $region24
      $region23: #{tpu_custom_call.1} parent=5 // pred_region
        // Predicated region
        $region25: #{tpu_custom_call.1} parent=23 // pred_check
          %p153 = pneg %p36
        $region26: #{tpu_custom_call.1} parent=23 // pred_check_branch
          %155 = sbr.rel (%p153) target = $region28
        $region27: #{tpu_custom_call.1} parent=23 // pred_region
          %s156 = sand.u32 %s26, 1
          %s157 = scalar_lea.sflag [#allocation3], %s156
          %s158 = sand.u32 %s26, 1
          %s159 = smul.addr %s158, 128
          %s160 = scalar_lea.vmem [#allocation2], %s159
          %s161 = smul.u32 4, %s16
          %s162 = ssub.s32 5, %s161
          %p163 = scmp.lt.s32.totalorder %s162, 4
          %s164 = scalar_select %p163, %s162, 4
          %s165 = smul.u32 64, %s164
          %s166 = smul.u32 %s165, 8
          %s168 = ssub.s32 2048, %s166
          %169 = vsyncadd %s157, %s168
          %p170 = scmp.ne.s32.totalorder 0, %s166
          %s171 = smul.addr %s161, 8
          %s172 = smul.addr %s171, 64
          %s173 = scalar_lea.hbm %s0, %s172
          %s174 = smul.u32 32, %s164
          %s175 = sshll.u32 %s160, 4
          %s176 = int_to_ptr.vmem [resolvable:$true] %s175
          %s177 = sshll.u32 %s174, 4
          %181 = dma.hbm_to_vmem [thread:$0]  (%p170), %s173, %s177, %s176, %s157, 512, 512, 32
        $region28: #{tpu_custom_call.1} parent=23 // pred_fallthru
          _
      $region24: #{tpu_custom_call.1} parent=5 // pred_fallthru
        _
      %p182 = scmp.le.s32.totalorder 1, %s16
      %p183 = scmp.lt.s32.totalorder %s16, 3
      %p184 = pnand %p182, %p183
      %p185 = pneg %p184
      // Predicated region
      $region29: #{tpu_custom_call.1} parent=5 // pred_check
        _
      $region30: #{tpu_custom_call.1} parent=5 // pred_check_branch
        %187 = sbr.rel (%p184) target = $region32
      $region31: #{tpu_custom_call.1} parent=5 // pred_region
        %s188 = ssub.s32 %s16, 1
        %s189 = sand.u32 %s29, 1
        %s190 = scalar_lea.sflag [#allocation3], %s189
        %s191 = sand.u32 %s29, 1
        %s192 = smul.addr %s191, 128
        %s193 = scalar_lea.vmem [#allocation2], %s192
        // Predicated region
        $region33: #{tpu_custom_call.1} parent=31 // pred_check
          %p194 = pneg %p42
        $region34: #{tpu_custom_call.1} parent=31 // pred_check_branch
          %196 = sbr.rel (%p194) target = $region36
        $region35: #{tpu_custom_call.1} parent=31 // pred_region
          %197 = dma.done %s190, 2048
        $region36: #{tpu_custom_call.1} parent=31 // pred_fallthru
          _
        // Predicated region
        $region37: #{tpu_custom_call.1} parent=31 // pred_check
          %p198 = pneg %p63
        $region38: #{tpu_custom_call.1} parent=31 // pred_check_branch
          %200 = sbr.rel (%p198) target = $region40
        $region39: #{tpu_custom_call.1} parent=31 // pred_region
          %201 = dma.done [#allocation6], 49152
        $region40: #{tpu_custom_call.1} parent=31 // pred_fallthru
          _
        // Predicated region
        $region41: #{tpu_custom_call.1} parent=31 // pred_check
          %p202 = pneg %p84
        $region42: #{tpu_custom_call.1} parent=31 // pred_check_branch
          %204 = sbr.rel (%p202) target = $region44
        $region43: #{tpu_custom_call.1} parent=31 // pred_region
          %205 = dma.done [#allocation6], 96
        $region44: #{tpu_custom_call.1} parent=31 // pred_fallthru
          _
        %s206 = sand.u32 %s29, 1
        %s207 = scalar_lea.sflag [#allocation3], %s206
        %s208 = sand.u32 %s29, 1
        %s209 = smul.addr %s208, 128
        %s210 = scalar_lea.vmem [#allocation2], %s209
        %p211 = pneg %p42
        %p212 = pneg %p39
        %p213 = pneg %p63
        %p214 = pneg %p60
        %p215 = pneg %p84
        %p216 = pneg %p81
        %p217 = pneg %p110
        %p218 = pneg %p107
        %s219 = sand.u32 %s97, 1
        %s220 = scalar_lea.sflag [#allocation4], %s219
        %s221 = sand.u32 %s97, 1
        %s222 = smul.addr %s221, 192
        %s223 = scalar_lea.vmem [#allocation8], %s222
        %s224 = smul.u32 4, %s21
        %s225 = ssub.s32 5, %s224
        %p226 = scmp.lt.s32.totalorder %s225, 4
        %s227 = scalar_select %p226, %s225, 4
        %s228 = smul.u32 64, %s227
        %s229 = smul.u32 %s228, 8
        %s230 = smul.u32 4, %s21
        %s231 = ssub.s32 5, %s230
        %p232 = scmp.lt.s32.totalorder %s231, 4
        %s233 = scalar_select %p232, %s231, 4
        %s234 = smul.u32 128, %s233
        %s235 = smul.u32 %s234, 6
        %v236 = vld [vmem:[%s193] sm:$0xff]
        %v237 = vld [vmem:[%s193 + $0x8] sm:$0xff]
        %v238 = vld [vmem:[%s193 + $0x10] sm:$0xff]
        %v239 = vld [vmem:[%s193 + $0x18] sm:$0xff]
        %v240 = vld [vmem:[%s193 + $0x20] sm:$0xff]
        %v241 = vld [vmem:[%s193 + $0x28] sm:$0xff]
        %v242 = vld [vmem:[%s193 + $0x30] sm:$0xff]
        %v243 = vld [vmem:[%s193 + $0x38] sm:$0xff]
        %v244 = vld [vmem:[%s193 + $0x40] sm:$0xff]
        %v245 = vld [vmem:[%s193 + $0x48] sm:$0xff]
        %v246 = vld [vmem:[%s193 + $0x50] sm:$0xff]
        %v247 = vld [vmem:[%s193 + $0x58] sm:$0xff]
        %v248 = vld [vmem:[%s193 + $0x60] sm:$0xff]
        %v249 = vld [vmem:[%s193 + $0x68] sm:$0xff]
        %v250 = vld [vmem:[%s193 + $0x70] sm:$0xff]
        %v251 = vld [vmem:[%s193 + $0x78] sm:$0xff]
        %v252 = vld [vmem:[#allocation5] sm:$0xff]
        %v253 = vld [vmem:[#allocation5 + $0x8] sm:$0xff]
        %v254 = vld [vmem:[#allocation5 + $0x10] sm:$0xff]
        %v255 = vld [vmem:[#allocation5 + $0x18] sm:$0xff]
        %v256 = vld [vmem:[#allocation5 + $0x20] sm:$0xff]
        %v257 = vld [vmem:[#allocation5 + $0x28] sm:$0xff]
        %v258 = vld [vmem:[#allocation5 + $0x30] sm:$0xff]
        %v259 = vld [vmem:[#allocation5 + $0x38] sm:$0xff]
        %v260 = vld [vmem:[#allocation5 + $0x40] sm:$0xff]
        %v261 = vld [vmem:[#allocation5 + $0x48] sm:$0xff]
        %v262 = vld [vmem:[#allocation5 + $0x50] sm:$0xff]
        %v263 = vld [vmem:[#allocation5 + $0x58] sm:$0xff]
        %v264 = vld [vmem:[#allocation5 + $0x60] sm:$0xff]
        %v265 = vld [vmem:[#allocation5 + $0x68] sm:$0xff]
        %v266 = vld [vmem:[#allocation5 + $0x70] sm:$0xff]
        %v267 = vld [vmem:[#allocation5 + $0x78] sm:$0xff]
        %v268 = vld [vmem:[#allocation5 + $0x80] sm:$0xff]
        %v269 = vld [vmem:[#allocation5 + $0x88] sm:$0xff]
        %v270 = vld [vmem:[#allocation5 + $0x90] sm:$0xff]
        %v271 = vld [vmem:[#allocation5 + $0x98] sm:$0xff]
        %v272 = vld [vmem:[#allocation5 + $0xa0] sm:$0xff]
        %v273 = vld [vmem:[#allocation5 + $0xa8] sm:$0xff]
        %v274 = vld [vmem:[#allocation5 + $0xb0] sm:$0xff]
        %v275 = vld [vmem:[#allocation5 + $0xb8] sm:$0xff]
        %v276 = vld [vmem:[#allocation5 + $0xc0] sm:$0xff]
        %v277 = vld [vmem:[#allocation5 + $0xc8] sm:$0xff]
        %v278 = vld [vmem:[#allocation5 + $0xd0] sm:$0xff]
        %v279 = vld [vmem:[#allocation5 + $0xd8] sm:$0xff]
        %v280 = vld [vmem:[#allocation5 + $0xe0] sm:$0xff]
        %v281 = vld [vmem:[#allocation5 + $0xe8] sm:$0xff]
        %v282 = vld [vmem:[#allocation5 + $0xf0] sm:$0xff]
        %v283 = vld [vmem:[#allocation5 + $0xf8] sm:$0xff]
        %v284 = vld [vmem:[#allocation5 + $0x100] sm:$0xff]
        %v285 = vld [vmem:[#allocation5 + $0x108] sm:$0xff]
        %v286 = vld [vmem:[#allocation5 + $0x110] sm:$0xff]
        %v287 = vld [vmem:[#allocation5 + $0x118] sm:$0xff]
        %v288 = vld [vmem:[#allocation5 + $0x120] sm:$0xff]
        %v289 = vld [vmem:[#allocation5 + $0x128] sm:$0xff]
        %v290 = vld [vmem:[#allocation5 + $0x130] sm:$0xff]
        %v291 = vld [vmem:[#allocation5 + $0x138] sm:$0xff]
        %v292 = vld [vmem:[#allocation5 + $0x140] sm:$0xff]
        %v293 = vld [vmem:[#allocation5 + $0x148] sm:$0xff]
        %v294 = vld [vmem:[#allocation5 + $0x150] sm:$0xff]
        %v295 = vld [vmem:[#allocation5 + $0x158] sm:$0xff]
        %v296 = vld [vmem:[#allocation5 + $0x160] sm:$0xff]
        %v297 = vld [vmem:[#allocation5 + $0x168] sm:$0xff]
        %v298 = vld [vmem:[#allocation5 + $0x170] sm:$0xff]
        %v299 = vld [vmem:[#allocation5 + $0x178] sm:$0xff]
        %v300 = vld [vmem:[#allocation5 + $0x180] sm:$0xff]
        %v301 = vld [vmem:[#allocation5 + $0x188] sm:$0xff]
        %v302 = vld [vmem:[#allocation5 + $0x190] sm:$0xff]
        %v303 = vld [vmem:[#allocation5 + $0x198] sm:$0xff]
        %v304 = vld [vmem:[#allocation5 + $0x1a0] sm:$0xff]
        %v305 = vld [vmem:[#allocation5 + $0x1a8] sm:$0xff]
        %v306 = vld [vmem:[#allocation5 + $0x1b0] sm:$0xff]
        %v307 = vld [vmem:[#allocation5 + $0x1b8] sm:$0xff]
        %v308 = vld [vmem:[#allocation5 + $0x1c0] sm:$0xff]
        %v309 = vld [vmem:[#allocation5 + $0x1c8] sm:$0xff]
        %v310 = vld [vmem:[#allocation5 + $0x1d0] sm:$0xff]
        %v311 = vld [vmem:[#allocation5 + $0x1d8] sm:$0xff]
        %v312 = vld [vmem:[#allocation5 + $0x1e0] sm:$0xff]
        %v313 = vld [vmem:[#allocation5 + $0x1e8] sm:$0xff]
        %v314 = vld [vmem:[#allocation5 + $0x1f0] sm:$0xff]
        %v315 = vld [vmem:[#allocation5 + $0x1f8] sm:$0xff]
        %v316 = vld [vmem:[#allocation5 + $0x200] sm:$0xff]
        %v317 = vld [vmem:[#allocation5 + $0x208] sm:$0xff]
        %v318 = vld [vmem:[#allocation5 + $0x210] sm:$0xff]
        %v319 = vld [vmem:[#allocation5 + $0x218] sm:$0xff]
        %v320 = vld [vmem:[#allocation5 + $0x220] sm:$0xff]
        %v321 = vld [vmem:[#allocation5 + $0x228] sm:$0xff]
        %v322 = vld [vmem:[#allocation5 + $0x230] sm:$0xff]
        %v323 = vld [vmem:[#allocation5 + $0x238] sm:$0xff]
        %v324 = vld [vmem:[#allocation5 + $0x240] sm:$0xff]
        %v325 = vld [vmem:[#allocation5 + $0x248] sm:$0xff]
        %v326 = vld [vmem:[#allocation5 + $0x250] sm:$0xff]
        %v327 = vld [vmem:[#allocation5 + $0x258] sm:$0xff]
        %v328 = vld [vmem:[#allocation5 + $0x260] sm:$0xff]
        %v329 = vld [vmem:[#allocation5 + $0x268] sm:$0xff]
        %v330 = vld [vmem:[#allocation5 + $0x270] sm:$0xff]
        %v331 = vld [vmem:[#allocation5 + $0x278] sm:$0xff]
        %v332 = vld [vmem:[#allocation5 + $0x280] sm:$0xff]
        %v333 = vld [vmem:[#allocation5 + $0x288] sm:$0xff]
        %v334 = vld [vmem:[#allocation5 + $0x290] sm:$0xff]
        %v335 = vld [vmem:[#allocation5 + $0x298] sm:$0xff]
        %v336 = vld [vmem:[#allocation5 + $0x2a0] sm:$0xff]
        %v337 = vld [vmem:[#allocation5 + $0x2a8] sm:$0xff]
        %v338 = vld [vmem:[#allocation5 + $0x2b0] sm:$0xff]
        %v339 = vld [vmem:[#allocation5 + $0x2b8] sm:$0xff]
        %v340 = vld [vmem:[#allocation5 + $0x2c0] sm:$0xff]
        %v341 = vld [vmem:[#allocation5 + $0x2c8] sm:$0xff]
        %v342 = vld [vmem:[#allocation5 + $0x2d0] sm:$0xff]
        %v343 = vld [vmem:[#allocation5 + $0x2d8] sm:$0xff]
        %v344 = vld [vmem:[#allocation5 + $0x2e0] sm:$0xff]
        %v345 = vld [vmem:[#allocation5 + $0x2e8] sm:$0xff]
        %v346 = vld [vmem:[#allocation5 + $0x2f0] sm:$0xff]
        %v347 = vld [vmem:[#allocation5 + $0x2f8] sm:$0xff]
        %v348 = vld [vmem:[#allocation5 + $0x300] sm:$0xff]
        %v349 = vld [vmem:[#allocation5 + $0x308] sm:$0xff]
        %v350 = vld [vmem:[#allocation5 + $0x310] sm:$0xff]
        %v351 = vld [vmem:[#allocation5 + $0x318] sm:$0xff]
        %v352 = vld [vmem:[#allocation5 + $0x320] sm:$0xff]
        %v353 = vld [vmem:[#allocation5 + $0x328] sm:$0xff]
        %v354 = vld [vmem:[#allocation5 + $0x330] sm:$0xff]
        %v355 = vld [vmem:[#allocation5 + $0x338] sm:$0xff]
        %v356 = vld [vmem:[#allocation5 + $0x340] sm:$0xff]
        %v357 = vld [vmem:[#allocation5 + $0x348] sm:$0xff]
        %v358 = vld [vmem:[#allocation5 + $0x350] sm:$0xff]
        %v359 = vld [vmem:[#allocation5 + $0x358] sm:$0xff]
        %v360 = vld [vmem:[#allocation5 + $0x360] sm:$0xff]
        %v361 = vld [vmem:[#allocation5 + $0x368] sm:$0xff]
        %v362 = vld [vmem:[#allocation5 + $0x370] sm:$0xff]
        %v363 = vld [vmem:[#allocation5 + $0x378] sm:$0xff]
        %v364 = vld [vmem:[#allocation5 + $0x380] sm:$0xff]
        %v365 = vld [vmem:[#allocation5 + $0x388] sm:$0xff]
        %v366 = vld [vmem:[#allocation5 + $0x390] sm:$0xff]
        %v367 = vld [vmem:[#allocation5 + $0x398] sm:$0xff]
        %v368 = vld [vmem:[#allocation5 + $0x3a0] sm:$0xff]
        %v369 = vld [vmem:[#allocation5 + $0x3a8] sm:$0xff]
        %v370 = vld [vmem:[#allocation5 + $0x3b0] sm:$0xff]
        %v371 = vld [vmem:[#allocation5 + $0x3b8] sm:$0xff]
        %v372 = vld [vmem:[#allocation5 + $0x3c0] sm:$0xff]
        %v373 = vld [vmem:[#allocation5 + $0x3c8] sm:$0xff]
        %v374 = vld [vmem:[#allocation5 + $0x3d0] sm:$0xff]
        %v375 = vld [vmem:[#allocation5 + $0x3d8] sm:$0xff]
        %v376 = vld [vmem:[#allocation5 + $0x3e0] sm:$0xff]
        %v377 = vld [vmem:[#allocation5 + $0x3e8] sm:$0xff]
        %v378 = vld [vmem:[#allocation5 + $0x3f0] sm:$0xff]
        %v379 = vld [vmem:[#allocation5 + $0x3f8] sm:$0xff]
        %v380 = vld [vmem:[#allocation5 + $0x400] sm:$0xff]
        %v381 = vld [vmem:[#allocation5 + $0x408] sm:$0xff]
        %v382 = vld [vmem:[#allocation5 + $0x410] sm:$0xff]
        %v383 = vld [vmem:[#allocation5 + $0x418] sm:$0xff]
        %v384 = vld [vmem:[#allocation5 + $0x420] sm:$0xff]
        %v385 = vld [vmem:[#allocation5 + $0x428] sm:$0xff]
        %v386 = vld [vmem:[#allocation5 + $0x430] sm:$0xff]
        %v387 = vld [vmem:[#allocation5 + $0x438] sm:$0xff]
        %v388 = vld [vmem:[#allocation5 + $0x440] sm:$0xff]
        %v389 = vld [vmem:[#allocation5 + $0x448] sm:$0xff]
        %v390 = vld [vmem:[#allocation5 + $0x450] sm:$0xff]
        %v391 = vld [vmem:[#allocation5 + $0x458] sm:$0xff]
        %v392 = vld [vmem:[#allocation5 + $0x460] sm:$0xff]
        %v393 = vld [vmem:[#allocation5 + $0x468] sm:$0xff]
        %v394 = vld [vmem:[#allocation5 + $0x470] sm:$0xff]
        %v395 = vld [vmem:[#allocation5 + $0x478] sm:$0xff]
        %v396 = vld [vmem:[#allocation5 + $0x480] sm:$0xff]
        %v397 = vld [vmem:[#allocation5 + $0x488] sm:$0xff]
        %v398 = vld [vmem:[#allocation5 + $0x490] sm:$0xff]
        %v399 = vld [vmem:[#allocation5 + $0x498] sm:$0xff]
        %v400 = vld [vmem:[#allocation5 + $0x4a0] sm:$0xff]
        %v401 = vld [vmem:[#allocation5 + $0x4a8] sm:$0xff]
        %v402 = vld [vmem:[#allocation5 + $0x4b0] sm:$0xff]
        %v403 = vld [vmem:[#allocation5 + $0x4b8] sm:$0xff]
        %v404 = vld [vmem:[#allocation5 + $0x4c0] sm:$0xff]
        %v405 = vld [vmem:[#allocation5 + $0x4c8] sm:$0xff]
        %v406 = vld [vmem:[#allocation5 + $0x4d0] sm:$0xff]
        %v407 = vld [vmem:[#allocation5 + $0x4d8] sm:$0xff]
        %v408 = vld [vmem:[#allocation5 + $0x4e0] sm:$0xff]
        %v409 = vld [vmem:[#allocation5 + $0x4e8] sm:$0xff]
        %v410 = vld [vmem:[#allocation5 + $0x4f0] sm:$0xff]
        %v411 = vld [vmem:[#allocation5 + $0x4f8] sm:$0xff]
        %v412 = vld [vmem:[#allocation5 + $0x500] sm:$0xff]
        %v413 = vld [vmem:[#allocation5 + $0x508] sm:$0xff]
        %v414 = vld [vmem:[#allocation5 + $0x510] sm:$0xff]
        %v415 = vld [vmem:[#allocation5 + $0x518] sm:$0xff]
        %v416 = vld [vmem:[#allocation5 + $0x520] sm:$0xff]
        %v417 = vld [vmem:[#allocation5 + $0x528] sm:$0xff]
        %v418 = vld [vmem:[#allocation5 + $0x530] sm:$0xff]
        %v419 = vld [vmem:[#allocation5 + $0x538] sm:$0xff]
        %v420 = vld [vmem:[#allocation5 + $0x540] sm:$0xff]
        %v421 = vld [vmem:[#allocation5 + $0x548] sm:$0xff]
        %v422 = vld [vmem:[#allocation5 + $0x550] sm:$0xff]
        %v423 = vld [vmem:[#allocation5 + $0x558] sm:$0xff]
        %v424 = vld [vmem:[#allocation5 + $0x560] sm:$0xff]
        %v425 = vld [vmem:[#allocation5 + $0x568] sm:$0xff]
        %v426 = vld [vmem:[#allocation5 + $0x570] sm:$0xff]
        %v427 = vld [vmem:[#allocation5 + $0x578] sm:$0xff]
        %v428 = vld [vmem:[#allocation5 + $0x580] sm:$0xff]
        %v429 = vld [vmem:[#allocation5 + $0x588] sm:$0xff]
        %v430 = vld [vmem:[#allocation5 + $0x590] sm:$0xff]
        %v431 = vld [vmem:[#allocation5 + $0x598] sm:$0xff]
        %v432 = vld [vmem:[#allocation5 + $0x5a0] sm:$0xff]
        %v433 = vld [vmem:[#allocation5 + $0x5a8] sm:$0xff]
        %v434 = vld [vmem:[#allocation5 + $0x5b0] sm:$0xff]
        %v435 = vld [vmem:[#allocation5 + $0x5b8] sm:$0xff]
        %v436 = vld [vmem:[#allocation5 + $0x5c0] sm:$0xff]
        %v437 = vld [vmem:[#allocation5 + $0x5c8] sm:$0xff]
        %v438 = vld [vmem:[#allocation5 + $0x5d0] sm:$0xff]
        %v439 = vld [vmem:[#allocation5 + $0x5d8] sm:$0xff]
        %v440 = vld [vmem:[#allocation5 + $0x5e0] sm:$0xff]
        %v441 = vld [vmem:[#allocation5 + $0x5e8] sm:$0xff]
        %v442 = vld [vmem:[#allocation5 + $0x5f0] sm:$0xff]
        %v443 = vld [vmem:[#allocation5 + $0x5f8] sm:$0xff]
        %v444 = vld [vmem:[#allocation5 + $0x600] sm:$0xff]
        %v445 = vld [vmem:[#allocation5 + $0x608] sm:$0xff]
        %v446 = vld [vmem:[#allocation5 + $0x610] sm:$0xff]
        %v447 = vld [vmem:[#allocation5 + $0x618] sm:$0xff]
        %v448 = vld [vmem:[#allocation5 + $0x620] sm:$0xff]
        %v449 = vld [vmem:[#allocation5 + $0x628] sm:$0xff]
        %v450 = vld [vmem:[#allocation5 + $0x630] sm:$0xff]
        %v451 = vld [vmem:[#allocation5 + $0x638] sm:$0xff]
        %v452 = vld [vmem:[#allocation5 + $0x640] sm:$0xff]
        %v453 = vld [vmem:[#allocation5 + $0x648] sm:$0xff]
        %v454 = vld [vmem:[#allocation5 + $0x650] sm:$0xff]
        %v455 = vld [vmem:[#allocation5 + $0x658] sm:$0xff]
        %v456 = vld [vmem:[#allocation5 + $0x660] sm:$0xff]
        %v457 = vld [vmem:[#allocation5 + $0x668] sm:$0xff]
        %v458 = vld [vmem:[#allocation5 + $0x670] sm:$0xff]
        %v459 = vld [vmem:[#allocation5 + $0x678] sm:$0xff]
        %v460 = vld [vmem:[#allocation5 + $0x680] sm:$0xff]
        %v461 = vld [vmem:[#allocation5 + $0x688] sm:$0xff]
        %v462 = vld [vmem:[#allocation5 + $0x690] sm:$0xff]
        %v463 = vld [vmem:[#allocation5 + $0x698] sm:$0xff]
        %v464 = vld [vmem:[#allocation5 + $0x6a0] sm:$0xff]
        %v465 = vld [vmem:[#allocation5 + $0x6a8] sm:$0xff]
        %v466 = vld [vmem:[#allocation5 + $0x6b0] sm:$0xff]
        %v467 = vld [vmem:[#allocation5 + $0x6b8] sm:$0xff]
        %v468 = vld [vmem:[#allocation5 + $0x6c0] sm:$0xff]
        %v469 = vld [vmem:[#allocation5 + $0x6c8] sm:$0xff]
        %v470 = vld [vmem:[#allocation5 + $0x6d0] sm:$0xff]
        %v471 = vld [vmem:[#allocation5 + $0x6d8] sm:$0xff]
        %v472 = vld [vmem:[#allocation5 + $0x6e0] sm:$0xff]
        %v473 = vld [vmem:[#allocation5 + $0x6e8] sm:$0xff]
        %v474 = vld [vmem:[#allocation5 + $0x6f0] sm:$0xff]
        %v475 = vld [vmem:[#allocation5 + $0x6f8] sm:$0xff]
        %v476 = vld [vmem:[#allocation5 + $0x700] sm:$0xff]
        %v477 = vld [vmem:[#allocation5 + $0x708] sm:$0xff]
        %v478 = vld [vmem:[#allocation5 + $0x710] sm:$0xff]
        %v479 = vld [vmem:[#allocation5 + $0x718] sm:$0xff]
        %v480 = vld [vmem:[#allocation5 + $0x720] sm:$0xff]
        %v481 = vld [vmem:[#allocation5 + $0x728] sm:$0xff]
        %v482 = vld [vmem:[#allocation5 + $0x730] sm:$0xff]
        %v483 = vld [vmem:[#allocation5 + $0x738] sm:$0xff]
        %v484 = vld [vmem:[#allocation5 + $0x740] sm:$0xff]
        %v485 = vld [vmem:[#allocation5 + $0x748] sm:$0xff]
        %v486 = vld [vmem:[#allocation5 + $0x750] sm:$0xff]
        %v487 = vld [vmem:[#allocation5 + $0x758] sm:$0xff]
        %v488 = vld [vmem:[#allocation5 + $0x760] sm:$0xff]
        %v489 = vld [vmem:[#allocation5 + $0x768] sm:$0xff]
        %v490 = vld [vmem:[#allocation5 + $0x770] sm:$0xff]
        %v491 = vld [vmem:[#allocation5 + $0x778] sm:$0xff]
        %v492 = vld [vmem:[#allocation5 + $0x780] sm:$0xff]
        %v493 = vld [vmem:[#allocation5 + $0x788] sm:$0xff]
        %v494 = vld [vmem:[#allocation5 + $0x790] sm:$0xff]
        %v495 = vld [vmem:[#allocation5 + $0x798] sm:$0xff]
        %v496 = vld [vmem:[#allocation5 + $0x7a0] sm:$0xff]
        %v497 = vld [vmem:[#allocation5 + $0x7a8] sm:$0xff]
        %v498 = vld [vmem:[#allocation5 + $0x7b0] sm:$0xff]
        %v499 = vld [vmem:[#allocation5 + $0x7b8] sm:$0xff]
        %v500 = vld [vmem:[#allocation5 + $0x7c0] sm:$0xff]
        %v501 = vld [vmem:[#allocation5 + $0x7c8] sm:$0xff]
        %v502 = vld [vmem:[#allocation5 + $0x7d0] sm:$0xff]
        %v503 = vld [vmem:[#allocation5 + $0x7d8] sm:$0xff]
        %v504 = vld [vmem:[#allocation5 + $0x7e0] sm:$0xff]
        %v505 = vld [vmem:[#allocation5 + $0x7e8] sm:$0xff]
        %v506 = vld [vmem:[#allocation5 + $0x7f0] sm:$0xff]
        %v507 = vld [vmem:[#allocation5 + $0x7f8] sm:$0xff]
        %v508 = vld [vmem:[#allocation5 + $0x800] sm:$0xff]
        %v509 = vld [vmem:[#allocation5 + $0x808] sm:$0xff]
        %v510 = vld [vmem:[#allocation5 + $0x810] sm:$0xff]
        %v511 = vld [vmem:[#allocation5 + $0x818] sm:$0xff]
        %v512 = vld [vmem:[#allocation5 + $0x820] sm:$0xff]
        %v513 = vld [vmem:[#allocation5 + $0x828] sm:$0xff]
        %v514 = vld [vmem:[#allocation5 + $0x830] sm:$0xff]
        %v515 = vld [vmem:[#allocation5 + $0x838] sm:$0xff]
        %v516 = vld [vmem:[#allocation5 + $0x840] sm:$0xff]
        %v517 = vld [vmem:[#allocation5 + $0x848] sm:$0xff]
        %v518 = vld [vmem:[#allocation5 + $0x850] sm:$0xff]
        %v519 = vld [vmem:[#allocation5 + $0x858] sm:$0xff]
        %v520 = vld [vmem:[#allocation5 + $0x860] sm:$0xff]
        %v521 = vld [vmem:[#allocation5 + $0x868] sm:$0xff]
        %v522 = vld [vmem:[#allocation5 + $0x870] sm:$0xff]
        %v523 = vld [vmem:[#allocation5 + $0x878] sm:$0xff]
        %v524 = vld [vmem:[#allocation5 + $0x880] sm:$0xff]
        %v525 = vld [vmem:[#allocation5 + $0x888] sm:$0xff]
        %v526 = vld [vmem:[#allocation5 + $0x890] sm:$0xff]
        %v527 = vld [vmem:[#allocation5 + $0x898] sm:$0xff]
        %v528 = vld [vmem:[#allocation5 + $0x8a0] sm:$0xff]
        %v529 = vld [vmem:[#allocation5 + $0x8a8] sm:$0xff]
        %v530 = vld [vmem:[#allocation5 + $0x8b0] sm:$0xff]
        %v531 = vld [vmem:[#allocation5 + $0x8b8] sm:$0xff]
        %v532 = vld [vmem:[#allocation5 + $0x8c0] sm:$0xff]
        %v533 = vld [vmem:[#allocation5 + $0x8c8] sm:$0xff]
        %v534 = vld [vmem:[#allocation5 + $0x8d0] sm:$0xff]
        %v535 = vld [vmem:[#allocation5 + $0x8d8] sm:$0xff]
        %v536 = vld [vmem:[#allocation5 + $0x8e0] sm:$0xff]
        %v537 = vld [vmem:[#allocation5 + $0x8e8] sm:$0xff]
        %v538 = vld [vmem:[#allocation5 + $0x8f0] sm:$0xff]
        %v539 = vld [vmem:[#allocation5 + $0x8f8] sm:$0xff]
        %v540 = vld [vmem:[#allocation5 + $0x900] sm:$0xff]
        %v541 = vld [vmem:[#allocation5 + $0x908] sm:$0xff]
        %v542 = vld [vmem:[#allocation5 + $0x910] sm:$0xff]
        %v543 = vld [vmem:[#allocation5 + $0x918] sm:$0xff]
        %v544 = vld [vmem:[#allocation5 + $0x920] sm:$0xff]
        %v545 = vld [vmem:[#allocation5 + $0x928] sm:$0xff]
        %v546 = vld [vmem:[#allocation5 + $0x930] sm:$0xff]
        %v547 = vld [vmem:[#allocation5 + $0x938] sm:$0xff]
        %v548 = vld [vmem:[#allocation5 + $0x940] sm:$0xff]
        %v549 = vld [vmem:[#allocation5 + $0x948] sm:$0xff]
        %v550 = vld [vmem:[#allocation5 + $0x950] sm:$0xff]
        %v551 = vld [vmem:[#allocation5 + $0x958] sm:$0xff]
        %v552 = vld [vmem:[#allocation5 + $0x960] sm:$0xff]
        %v553 = vld [vmem:[#allocation5 + $0x968] sm:$0xff]
        %v554 = vld [vmem:[#allocation5 + $0x970] sm:$0xff]
        %v555 = vld [vmem:[#allocation5 + $0x978] sm:$0xff]
        %v556 = vld [vmem:[#allocation5 + $0x980] sm:$0xff]
        %v557 = vld [vmem:[#allocation5 + $0x988] sm:$0xff]
        %v558 = vld [vmem:[#allocation5 + $0x990] sm:$0xff]
        %v559 = vld [vmem:[#allocation5 + $0x998] sm:$0xff]
        %v560 = vld [vmem:[#allocation5 + $0x9a0] sm:$0xff]
        %v561 = vld [vmem:[#allocation5 + $0x9a8] sm:$0xff]
        %v562 = vld [vmem:[#allocation5 + $0x9b0] sm:$0xff]
        %v563 = vld [vmem:[#allocation5 + $0x9b8] sm:$0xff]
        %v564 = vld [vmem:[#allocation5 + $0x9c0] sm:$0xff]
        %v565 = vld [vmem:[#allocation5 + $0x9c8] sm:$0xff]
        %v566 = vld [vmem:[#allocation5 + $0x9d0] sm:$0xff]
        %v567 = vld [vmem:[#allocation5 + $0x9d8] sm:$0xff]
        %v568 = vld [vmem:[#allocation5 + $0x9e0] sm:$0xff]
        %v569 = vld [vmem:[#allocation5 + $0x9e8] sm:$0xff]
        %v570 = vld [vmem:[#allocation5 + $0x9f0] sm:$0xff]
        %v571 = vld [vmem:[#allocation5 + $0x9f8] sm:$0xff]
        %v572 = vld [vmem:[#allocation5 + $0xa00] sm:$0xff]
        %v573 = vld [vmem:[#allocation5 + $0xa08] sm:$0xff]
        %v574 = vld [vmem:[#allocation5 + $0xa10] sm:$0xff]
        %v575 = vld [vmem:[#allocation5 + $0xa18] sm:$0xff]
        %v576 = vld [vmem:[#allocation5 + $0xa20] sm:$0xff]
        %v577 = vld [vmem:[#allocation5 + $0xa28] sm:$0xff]
        %v578 = vld [vmem:[#allocation5 + $0xa30] sm:$0xff]
        %v579 = vld [vmem:[#allocation5 + $0xa38] sm:$0xff]
        %v580 = vld [vmem:[#allocation5 + $0xa40] sm:$0xff]
        %v581 = vld [vmem:[#allocation5 + $0xa48] sm:$0xff]
        %v582 = vld [vmem:[#allocation5 + $0xa50] sm:$0xff]
        %v583 = vld [vmem:[#allocation5 + $0xa58] sm:$0xff]
        %v584 = vld [vmem:[#allocation5 + $0xa60] sm:$0xff]
        %v585 = vld [vmem:[#allocation5 + $0xa68] sm:$0xff]
        %v586 = vld [vmem:[#allocation5 + $0xa70] sm:$0xff]
        %v587 = vld [vmem:[#allocation5 + $0xa78] sm:$0xff]
        %v588 = vld [vmem:[#allocation5 + $0xa80] sm:$0xff]
        %v589 = vld [vmem:[#allocation5 + $0xa88] sm:$0xff]
        %v590 = vld [vmem:[#allocation5 + $0xa90] sm:$0xff]
        %v591 = vld [vmem:[#allocation5 + $0xa98] sm:$0xff]
        %v592 = vld [vmem:[#allocation5 + $0xaa0] sm:$0xff]
        %v593 = vld [vmem:[#allocation5 + $0xaa8] sm:$0xff]
        %v594 = vld [vmem:[#allocation5 + $0xab0] sm:$0xff]
        %v595 = vld [vmem:[#allocation5 + $0xab8] sm:$0xff]
        %v596 = vld [vmem:[#allocation5 + $0xac0] sm:$0xff]
        %v597 = vld [vmem:[#allocation5 + $0xac8] sm:$0xff]
        %v598 = vld [vmem:[#allocation5 + $0xad0] sm:$0xff]
        %v599 = vld [vmem:[#allocation5 + $0xad8] sm:$0xff]
        %v600 = vld [vmem:[#allocation5 + $0xae0] sm:$0xff]
        %v601 = vld [vmem:[#allocation5 + $0xae8] sm:$0xff]
        %v602 = vld [vmem:[#allocation5 + $0xaf0] sm:$0xff]
        %v603 = vld [vmem:[#allocation5 + $0xaf8] sm:$0xff]
        %v604 = vld [vmem:[#allocation5 + $0xb00] sm:$0xff]
        %v605 = vld [vmem:[#allocation5 + $0xb08] sm:$0xff]
        %v606 = vld [vmem:[#allocation5 + $0xb10] sm:$0xff]
        %v607 = vld [vmem:[#allocation5 + $0xb18] sm:$0xff]
        %v608 = vld [vmem:[#allocation5 + $0xb20] sm:$0xff]
        %v609 = vld [vmem:[#allocation5 + $0xb28] sm:$0xff]
        %v610 = vld [vmem:[#allocation5 + $0xb30] sm:$0xff]
        %v611 = vld [vmem:[#allocation5 + $0xb38] sm:$0xff]
        %v612 = vld [vmem:[#allocation5 + $0xb40] sm:$0xff]
        %v613 = vld [vmem:[#allocation5 + $0xb48] sm:$0xff]
        %v614 = vld [vmem:[#allocation5 + $0xb50] sm:$0xff]
        %v615 = vld [vmem:[#allocation5 + $0xb58] sm:$0xff]
        %v616 = vld [vmem:[#allocation5 + $0xb60] sm:$0xff]
        %v617 = vld [vmem:[#allocation5 + $0xb68] sm:$0xff]
        %v618 = vld [vmem:[#allocation5 + $0xb70] sm:$0xff]
        %v619 = vld [vmem:[#allocation5 + $0xb78] sm:$0xff]
        %v620 = vld [vmem:[#allocation5 + $0xb80] sm:$0xff]
        %v621 = vld [vmem:[#allocation5 + $0xb88] sm:$0xff]
        %v622 = vld [vmem:[#allocation5 + $0xb90] sm:$0xff]
        %v623 = vld [vmem:[#allocation5 + $0xb98] sm:$0xff]
        %v624 = vld [vmem:[#allocation5 + $0xba0] sm:$0xff]
        %v625 = vld [vmem:[#allocation5 + $0xba8] sm:$0xff]
        %v626 = vld [vmem:[#allocation5 + $0xbb0] sm:$0xff]
        %v627 = vld [vmem:[#allocation5 + $0xbb8] sm:$0xff]
        %v628 = vld [vmem:[#allocation5 + $0xbc0] sm:$0xff]
        %v629 = vld [vmem:[#allocation5 + $0xbc8] sm:$0xff]
        %v630 = vld [vmem:[#allocation5 + $0xbd0] sm:$0xff]
        %v631 = vld [vmem:[#allocation5 + $0xbd8] sm:$0xff]
        %v632 = vld [vmem:[#allocation5 + $0xbe0] sm:$0xff]
        %v633 = vld [vmem:[#allocation5 + $0xbe8] sm:$0xff]
        %v634 = vld [vmem:[#allocation5 + $0xbf0] sm:$0xff]
        %v635 = vld [vmem:[#allocation5 + $0xbf8] sm:$0xff]
        %v636 = vld [vmem:[#allocation7] sm:$0x3f]
        %v638 = vlaneseq
        %v639 = vshrl.u32 %v638, 7
        %v640 = vsub.s32 0, %v639
        %v641 = vrot.slane %v636, %v640
        %v642 = vlaneseq
        %v643 = vshrl.u32 %v642, 7
        %v644 = vsub.s32 1, %v643
        %v645 = vrot.slane %v636, %v644
        %v646 = vlaneseq
        %v647 = vshrl.u32 %v646, 7
        %v648 = vsub.s32 2, %v647
        %v649 = vrot.slane %v636, %v648
        %v650 = vlaneseq
        %v651 = vshrl.u32 %v650, 7
        %v652 = vsub.s32 3, %v651
        %v653 = vrot.slane %v636, %v652
        %v654 = vlaneseq
        %v655 = vshrl.u32 %v654, 7
        %v656 = vsub.s32 4, %v655
        %v657 = vrot.slane %v636, %v656
        %v658 = vlaneseq
        %v659 = vshrl.u32 %v658, 7
        %v660 = vsub.s32 5, %v659
        %v661 = vrot.slane %v636, %v660
        %v684 = vunpack.c.l.b16 %v236
        %v685 = vunpack.c.h.b16 %v236
        %v686 = vunpack.c.l.b16 %v237
        %v687 = vunpack.c.h.b16 %v237
        %v688 = vunpack.c.l.b16 %v238
        %v689 = vunpack.c.h.b16 %v238
        %v690 = vunpack.c.l.b16 %v239
        %v691 = vunpack.c.h.b16 %v239
        %v692 = vunpack.c.l.b16 %v240
        %v693 = vunpack.c.h.b16 %v240
        %v694 = vunpack.c.l.b16 %v241
        %v695 = vunpack.c.h.b16 %v241
        %v696 = vunpack.c.l.b16 %v242
        %v697 = vunpack.c.h.b16 %v242
        %v698 = vunpack.c.l.b16 %v243
        %v699 = vunpack.c.h.b16 %v243
        %v700 = vunpack.c.l.b16 %v244
        %v701 = vunpack.c.h.b16 %v244
        %v702 = vunpack.c.l.b16 %v245
        %v703 = vunpack.c.h.b16 %v245
        %v704 = vunpack.c.l.b16 %v246
        %v705 = vunpack.c.h.b16 %v246
        %v706 = vunpack.c.l.b16 %v247
        %v707 = vunpack.c.h.b16 %v247
        %v708 = vunpack.c.l.b16 %v248
        %v709 = vunpack.c.h.b16 %v248
        %v710 = vunpack.c.l.b16 %v249
        %v711 = vunpack.c.h.b16 %v249
        %v712 = vunpack.c.l.b16 %v250
        %v713 = vunpack.c.h.b16 %v250
        %v714 = vunpack.c.l.b16 %v251
        %v715 = vunpack.c.h.b16 %v251
        %v716 = vpack.c.b16 %v692, %v684
        %v717 = vpack.c.b16 %v693, %v685
        %v718 = vpack.c.b16 %v694, %v686
        %v719 = vpack.c.b16 %v695, %v687
        %v720 = vpack.c.b16 %v696, %v688
        %v721 = vpack.c.b16 %v697, %v689
        %v722 = vpack.c.b16 %v698, %v690
        %v723 = vpack.c.b16 %v699, %v691
        %v724 = vpack.c.b16 %v708, %v700
        %v725 = vpack.c.b16 %v709, %v701
        %v726 = vpack.c.b16 %v710, %v702
        %v727 = vpack.c.b16 %v711, %v703
        %v728 = vpack.c.b16 %v712, %v704
        %v729 = vpack.c.b16 %v713, %v705
        %v730 = vpack.c.b16 %v714, %v706
        %v731 = vpack.c.b16 %v715, %v707
        %v1132 = vunpack.c.l.b16 %v252
        %v1133 = vunpack.c.h.b16 %v252
        %v1134 = vunpack.c.l.b16 %v253
        %v1135 = vunpack.c.h.b16 %v253
        %v1136 = vunpack.c.l.b16 %v254
        %v1137 = vunpack.c.h.b16 %v254
        %v1138 = vunpack.c.l.b16 %v255
        %v1139 = vunpack.c.h.b16 %v255
        %v1140 = vunpack.c.l.b16 %v256
        %v1141 = vunpack.c.h.b16 %v256
        %v1142 = vunpack.c.l.b16 %v257
        %v1143 = vunpack.c.h.b16 %v257
        %v1144 = vunpack.c.l.b16 %v258
        %v1145 = vunpack.c.h.b16 %v258
        %v1146 = vunpack.c.l.b16 %v259
        %v1147 = vunpack.c.h.b16 %v259
        %v1148 = vunpack.c.l.b16 %v260
        %v1149 = vunpack.c.h.b16 %v260
        %v1150 = vunpack.c.l.b16 %v261
        %v1151 = vunpack.c.h.b16 %v261
        %v1152 = vunpack.c.l.b16 %v262
        %v1153 = vunpack.c.h.b16 %v262
        %v1154 = vunpack.c.l.b16 %v263
        %v1155 = vunpack.c.h.b16 %v263
        %v1156 = vunpack.c.l.b16 %v264
        %v1157 = vunpack.c.h.b16 %v264
        %v1158 = vunpack.c.l.b16 %v265
        %v1159 = vunpack.c.h.b16 %v265
        %v1160 = vunpack.c.l.b16 %v266
        %v1161 = vunpack.c.h.b16 %v266
        %v1162 = vunpack.c.l.b16 %v267
        %v1163 = vunpack.c.h.b16 %v267
        %v1164 = vunpack.c.l.b16 %v268
        %v1165 = vunpack.c.h.b16 %v268
        %v1166 = vunpack.c.l.b16 %v269
        %v1167 = vunpack.c.h.b16 %v269
        %v1168 = vunpack.c.l.b16 %v270
        %v1169 = vunpack.c.h.b16 %v270
        %v1170 = vunpack.c.l.b16 %v271
        %v1171 = vunpack.c.h.b16 %v271
        %v1172 = vunpack.c.l.b16 %v272
        %v1173 = vunpack.c.h.b16 %v272
        %v1174 = vunpack.c.l.b16 %v273
        %v1175 = vunpack.c.h.b16 %v273
        %v1176 = vunpack.c.l.b16 %v274
        %v1177 = vunpack.c.h.b16 %v274
        %v1178 = vunpack.c.l.b16 %v275
        %v1179 = vunpack.c.h.b16 %v275
        %v1180 = vunpack.c.l.b16 %v276
        %v1181 = vunpack.c.h.b16 %v276
        %v1182 = vunpack.c.l.b16 %v277
        %v1183 = vunpack.c.h.b16 %v277
        %v1184 = vunpack.c.l.b16 %v278
        %v1185 = vunpack.c.h.b16 %v278
        %v1186 = vunpack.c.l.b16 %v279
        %v1187 = vunpack.c.h.b16 %v279
        %v1188 = vunpack.c.l.b16 %v280
        %v1189 = vunpack.c.h.b16 %v280
        %v1190 = vunpack.c.l.b16 %v281
        %v1191 = vunpack.c.h.b16 %v281
        %v1192 = vunpack.c.l.b16 %v282
        %v1193 = vunpack.c.h.b16 %v282
        %v1194 = vunpack.c.l.b16 %v283
        %v1195 = vunpack.c.h.b16 %v283
        %v1196 = vunpack.c.l.b16 %v284
        %v1197 = vunpack.c.h.b16 %v284
        %v1198 = vunpack.c.l.b16 %v285
        %v1199 = vunpack.c.h.b16 %v285
        %v1200 = vunpack.c.l.b16 %v286
        %v1201 = vunpack.c.h.b16 %v286
        %v1202 = vunpack.c.l.b16 %v287
        %v1203 = vunpack.c.h.b16 %v287
        %v1204 = vunpack.c.l.b16 %v288
        %v1205 = vunpack.c.h.b16 %v288
        %v1206 = vunpack.c.l.b16 %v289
        %v1207 = vunpack.c.h.b16 %v289
        %v1208 = vunpack.c.l.b16 %v290
        %v1209 = vunpack.c.h.b16 %v290
        %v1210 = vunpack.c.l.b16 %v291
        %v1211 = vunpack.c.h.b16 %v291
        %v1212 = vunpack.c.l.b16 %v292
        %v1213 = vunpack.c.h.b16 %v292
        %v1214 = vunpack.c.l.b16 %v293
        %v1215 = vunpack.c.h.b16 %v293
        %v1216 = vunpack.c.l.b16 %v294
        %v1217 = vunpack.c.h.b16 %v294
        %v1218 = vunpack.c.l.b16 %v295
        %v1219 = vunpack.c.h.b16 %v295
        %v1220 = vunpack.c.l.b16 %v296
        %v1221 = vunpack.c.h.b16 %v296
        %v1222 = vunpack.c.l.b16 %v297
        %v1223 = vunpack.c.h.b16 %v297
        %v1224 = vunpack.c.l.b16 %v298
        %v1225 = vunpack.c.h.b16 %v298
        %v1226 = vunpack.c.l.b16 %v299
        %v1227 = vunpack.c.h.b16 %v299
        %v1228 = vunpack.c.l.b16 %v300
        %v1229 = vunpack.c.h.b16 %v300
        %v1230 = vunpack.c.l.b16 %v301
        %v1231 = vunpack.c.h.b16 %v301
        %v1232 = vunpack.c.l.b16 %v302
        %v1233 = vunpack.c.h.b16 %v302
        %v1234 = vunpack.c.l.b16 %v303
        %v1235 = vunpack.c.h.b16 %v303
        %v1236 = vunpack.c.l.b16 %v304
        %v1237 = vunpack.c.h.b16 %v304
        %v1238 = vunpack.c.l.b16 %v305
        %v1239 = vunpack.c.h.b16 %v305
        %v1240 = vunpack.c.l.b16 %v306
        %v1241 = vunpack.c.h.b16 %v306
        %v1242 = vunpack.c.l.b16 %v307
        %v1243 = vunpack.c.h.b16 %v307
        %v1244 = vunpack.c.l.b16 %v308
        %v1245 = vunpack.c.h.b16 %v308
        %v1246 = vunpack.c.l.b16 %v309
        %v1247 = vunpack.c.h.b16 %v309
        %v1248 = vunpack.c.l.b16 %v310
        %v1249 = vunpack.c.h.b16 %v310
        %v1250 = vunpack.c.l.b16 %v311
        %v1251 = vunpack.c.h.b16 %v311
        %v1252 = vunpack.c.l.b16 %v312
        %v1253 = vunpack.c.h.b16 %v312
        %v1254 = vunpack.c.l.b16 %v313
        %v1255 = vunpack.c.h.b16 %v313
        %v1256 = vunpack.c.l.b16 %v314
        %v1257 = vunpack.c.h.b16 %v314
        %v1258 = vunpack.c.l.b16 %v315
        %v1259 = vunpack.c.h.b16 %v315
        %v1260 = vunpack.c.l.b16 %v316
        %v1261 = vunpack.c.h.b16 %v316
        %v1262 = vunpack.c.l.b16 %v317
        %v1263 = vunpack.c.h.b16 %v317
        %v1264 = vunpack.c.l.b16 %v318
        %v1265 = vunpack.c.h.b16 %v318
        %v1266 = vunpack.c.l.b16 %v319
        %v1267 = vunpack.c.h.b16 %v319
        %v1268 = vunpack.c.l.b16 %v320
        %v1269 = vunpack.c.h.b16 %v320
        %v1270 = vunpack.c.l.b16 %v321
        %v1271 = vunpack.c.h.b16 %v321
        %v1272 = vunpack.c.l.b16 %v322
        %v1273 = vunpack.c.h.b16 %v322
        %v1274 = vunpack.c.l.b16 %v323
        %v1275 = vunpack.c.h.b16 %v323
        %v1276 = vunpack.c.l.b16 %v324
        %v1277 = vunpack.c.h.b16 %v324
        %v1278 = vunpack.c.l.b16 %v325
        %v1279 = vunpack.c.h.b16 %v325
        %v1280 = vunpack.c.l.b16 %v326
        %v1281 = vunpack.c.h.b16 %v326
        %v1282 = vunpack.c.l.b16 %v327
        %v1283 = vunpack.c.h.b16 %v327
        %v1284 = vunpack.c.l.b16 %v328
        %v1285 = vunpack.c.h.b16 %v328
        %v1286 = vunpack.c.l.b16 %v329
        %v1287 = vunpack.c.h.b16 %v329
        %v1288 = vunpack.c.l.b16 %v330
        %v1289 = vunpack.c.h.b16 %v330
        %v1290 = vunpack.c.l.b16 %v331
        %v1291 = vunpack.c.h.b16 %v331
        %v1292 = vunpack.c.l.b16 %v332
        %v1293 = vunpack.c.h.b16 %v332
        %v1294 = vunpack.c.l.b16 %v333
        %v1295 = vunpack.c.h.b16 %v333
        %v1296 = vunpack.c.l.b16 %v334
        %v1297 = vunpack.c.h.b16 %v334
        %v1298 = vunpack.c.l.b16 %v335
        %v1299 = vunpack.c.h.b16 %v335
        %v1300 = vunpack.c.l.b16 %v336
        %v1301 = vunpack.c.h.b16 %v336
        %v1302 = vunpack.c.l.b16 %v337
        %v1303 = vunpack.c.h.b16 %v337
        %v1304 = vunpack.c.l.b16 %v338
        %v1305 = vunpack.c.h.b16 %v338
        %v1306 = vunpack.c.l.b16 %v339
        %v1307 = vunpack.c.h.b16 %v339
        %v1308 = vunpack.c.l.b16 %v340
        %v1309 = vunpack.c.h.b16 %v340
        %v1310 = vunpack.c.l.b16 %v341
        %v1311 = vunpack.c.h.b16 %v341
        %v1312 = vunpack.c.l.b16 %v342
        %v1313 = vunpack.c.h.b16 %v342
        %v1314 = vunpack.c.l.b16 %v343
        %v1315 = vunpack.c.h.b16 %v343
        %v1316 = vunpack.c.l.b16 %v344
        %v1317 = vunpack.c.h.b16 %v344
        %v1318 = vunpack.c.l.b16 %v345
        %v1319 = vunpack.c.h.b16 %v345
        %v1320 = vunpack.c.l.b16 %v346
        %v1321 = vunpack.c.h.b16 %v346
        %v1322 = vunpack.c.l.b16 %v347
        %v1323 = vunpack.c.h.b16 %v347
        %v1324 = vunpack.c.l.b16 %v348
        %v1325 = vunpack.c.h.b16 %v348
        %v1326 = vunpack.c.l.b16 %v349
        %v1327 = vunpack.c.h.b16 %v349
        %v1328 = vunpack.c.l.b16 %v350
        %v1329 = vunpack.c.h.b16 %v350
        %v1330 = vunpack.c.l.b16 %v351
        %v1331 = vunpack.c.h.b16 %v351
        %v1332 = vunpack.c.l.b16 %v352
        %v1333 = vunpack.c.h.b16 %v352
        %v1334 = vunpack.c.l.b16 %v353
        %v1335 = vunpack.c.h.b16 %v353
        %v1336 = vunpack.c.l.b16 %v354
        %v1337 = vunpack.c.h.b16 %v354
        %v1338 = vunpack.c.l.b16 %v355
        %v1339 = vunpack.c.h.b16 %v355
        %v1340 = vunpack.c.l.b16 %v356
        %v1341 = vunpack.c.h.b16 %v356
        %v1342 = vunpack.c.l.b16 %v357
        %v1343 = vunpack.c.h.b16 %v357
        %v1344 = vunpack.c.l.b16 %v358
        %v1345 = vunpack.c.h.b16 %v358
        %v1346 = vunpack.c.l.b16 %v359
        %v1347 = vunpack.c.h.b16 %v359
        %v1348 = vunpack.c.l.b16 %v360
        %v1349 = vunpack.c.h.b16 %v360
        %v1350 = vunpack.c.l.b16 %v361
        %v1351 = vunpack.c.h.b16 %v361
        %v1352 = vunpack.c.l.b16 %v362
        %v1353 = vunpack.c.h.b16 %v362
        %v1354 = vunpack.c.l.b16 %v363
        %v1355 = vunpack.c.h.b16 %v363
        %v1356 = vunpack.c.l.b16 %v364
        %v1357 = vunpack.c.h.b16 %v364
        %v1358 = vunpack.c.l.b16 %v365
        %v1359 = vunpack.c.h.b16 %v365
        %v1360 = vunpack.c.l.b16 %v366
        %v1361 = vunpack.c.h.b16 %v366
        %v1362 = vunpack.c.l.b16 %v367
        %v1363 = vunpack.c.h.b16 %v367
        %v1364 = vunpack.c.l.b16 %v368
        %v1365 = vunpack.c.h.b16 %v368
        %v1366 = vunpack.c.l.b16 %v369
        %v1367 = vunpack.c.h.b16 %v369
        %v1368 = vunpack.c.l.b16 %v370
        %v1369 = vunpack.c.h.b16 %v370
        %v1370 = vunpack.c.l.b16 %v371
        %v1371 = vunpack.c.h.b16 %v371
        %v1372 = vunpack.c.l.b16 %v372
        %v1373 = vunpack.c.h.b16 %v372
        %v1374 = vunpack.c.l.b16 %v373
        %v1375 = vunpack.c.h.b16 %v373
        %v1376 = vunpack.c.l.b16 %v374
        %v1377 = vunpack.c.h.b16 %v374
        %v1378 = vunpack.c.l.b16 %v375
        %v1379 = vunpack.c.h.b16 %v375
        %v1380 = vunpack.c.l.b16 %v376
        %v1381 = vunpack.c.h.b16 %v376
        %v1382 = vunpack.c.l.b16 %v377
        %v1383 = vunpack.c.h.b16 %v377
        %v1384 = vunpack.c.l.b16 %v378
        %v1385 = vunpack.c.h.b16 %v378
        %v1386 = vunpack.c.l.b16 %v379
        %v1387 = vunpack.c.h.b16 %v379
        %v1388 = vunpack.c.l.b16 %v380
        %v1389 = vunpack.c.h.b16 %v380
        %v1390 = vunpack.c.l.b16 %v381
        %v1391 = vunpack.c.h.b16 %v381
        %v1392 = vunpack.c.l.b16 %v382
        %v1393 = vunpack.c.h.b16 %v382
        %v1394 = vunpack.c.l.b16 %v383
        %v1395 = vunpack.c.h.b16 %v383
        %v1396 = vunpack.c.l.b16 %v384
        %v1397 = vunpack.c.h.b16 %v384
        %v1398 = vunpack.c.l.b16 %v385
        %v1399 = vunpack.c.h.b16 %v385
        %v1400 = vunpack.c.l.b16 %v386
        %v1401 = vunpack.c.h.b16 %v386
        %v1402 = vunpack.c.l.b16 %v387
        %v1403 = vunpack.c.h.b16 %v387
        %v1404 = vunpack.c.l.b16 %v388
        %v1405 = vunpack.c.h.b16 %v388
        %v1406 = vunpack.c.l.b16 %v389
        %v1407 = vunpack.c.h.b16 %v389
        %v1408 = vunpack.c.l.b16 %v390
        %v1409 = vunpack.c.h.b16 %v390
        %v1410 = vunpack.c.l.b16 %v391
        %v1411 = vunpack.c.h.b16 %v391
        %v1412 = vunpack.c.l.b16 %v392
        %v1413 = vunpack.c.h.b16 %v392
        %v1414 = vunpack.c.l.b16 %v393
        %v1415 = vunpack.c.h.b16 %v393
        %v1416 = vunpack.c.l.b16 %v394
        %v1417 = vunpack.c.h.b16 %v394
        %v1418 = vunpack.c.l.b16 %v395
        %v1419 = vunpack.c.h.b16 %v395
        %v1420 = vunpack.c.l.b16 %v396
        %v1421 = vunpack.c.h.b16 %v396
        %v1422 = vunpack.c.l.b16 %v397
        %v1423 = vunpack.c.h.b16 %v397
        %v1424 = vunpack.c.l.b16 %v398
        %v1425 = vunpack.c.h.b16 %v398
        %v1426 = vunpack.c.l.b16 %v399
        %v1427 = vunpack.c.h.b16 %v399
        %v1428 = vunpack.c.l.b16 %v400
        %v1429 = vunpack.c.h.b16 %v400
        %v1430 = vunpack.c.l.b16 %v401
        %v1431 = vunpack.c.h.b16 %v401
        %v1432 = vunpack.c.l.b16 %v402
        %v1433 = vunpack.c.h.b16 %v402
        %v1434 = vunpack.c.l.b16 %v403
        %v1435 = vunpack.c.h.b16 %v403
        %v1436 = vunpack.c.l.b16 %v404
        %v1437 = vunpack.c.h.b16 %v404
        %v1438 = vunpack.c.l.b16 %v405
        %v1439 = vunpack.c.h.b16 %v405
        %v1440 = vunpack.c.l.b16 %v406
        %v1441 = vunpack.c.h.b16 %v406
        %v1442 = vunpack.c.l.b16 %v407
        %v1443 = vunpack.c.h.b16 %v407
        %v1444 = vunpack.c.l.b16 %v408
        %v1445 = vunpack.c.h.b16 %v408
        %v1446 = vunpack.c.l.b16 %v409
        %v1447 = vunpack.c.h.b16 %v409
        %v1448 = vunpack.c.l.b16 %v410
        %v1449 = vunpack.c.h.b16 %v410
        %v1450 = vunpack.c.l.b16 %v411
        %v1451 = vunpack.c.h.b16 %v411
        %v1452 = vunpack.c.l.b16 %v412
        %v1453 = vunpack.c.h.b16 %v412
        %v1454 = vunpack.c.l.b16 %v413
        %v1455 = vunpack.c.h.b16 %v413
        %v1456 = vunpack.c.l.b16 %v414
        %v1457 = vunpack.c.h.b16 %v414
        %v1458 = vunpack.c.l.b16 %v415
        %v1459 = vunpack.c.h.b16 %v415
        %v1460 = vunpack.c.l.b16 %v416
        %v1461 = vunpack.c.h.b16 %v416
        %v1462 = vunpack.c.l.b16 %v417
        %v1463 = vunpack.c.h.b16 %v417
        %v1464 = vunpack.c.l.b16 %v418
        %v1465 = vunpack.c.h.b16 %v418
        %v1466 = vunpack.c.l.b16 %v419
        %v1467 = vunpack.c.h.b16 %v419
        %v1468 = vunpack.c.l.b16 %v420
        %v1469 = vunpack.c.h.b16 %v420
        %v1470 = vunpack.c.l.b16 %v421
        %v1471 = vunpack.c.h.b16 %v421
        %v1472 = vunpack.c.l.b16 %v422
        %v1473 = vunpack.c.h.b16 %v422
        %v1474 = vunpack.c.l.b16 %v423
        %v1475 = vunpack.c.h.b16 %v423
        %v1476 = vunpack.c.l.b16 %v424
        %v1477 = vunpack.c.h.b16 %v424
        %v1478 = vunpack.c.l.b16 %v425
        %v1479 = vunpack.c.h.b16 %v425
        %v1480 = vunpack.c.l.b16 %v426
        %v1481 = vunpack.c.h.b16 %v426
        %v1482 = vunpack.c.l.b16 %v427
        %v1483 = vunpack.c.h.b16 %v427
        %v1484 = vunpack.c.l.b16 %v428
        %v1485 = vunpack.c.h.b16 %v428
        %v1486 = vunpack.c.l.b16 %v429
        %v1487 = vunpack.c.h.b16 %v429
        %v1488 = vunpack.c.l.b16 %v430
        %v1489 = vunpack.c.h.b16 %v430
        %v1490 = vunpack.c.l.b16 %v431
        %v1491 = vunpack.c.h.b16 %v431
        %v1492 = vunpack.c.l.b16 %v432
        %v1493 = vunpack.c.h.b16 %v432
        %v1494 = vunpack.c.l.b16 %v433
        %v1495 = vunpack.c.h.b16 %v433
        %v1496 = vunpack.c.l.b16 %v434
        %v1497 = vunpack.c.h.b16 %v434
        %v1498 = vunpack.c.l.b16 %v435
        %v1499 = vunpack.c.h.b16 %v435
        %v1500 = vunpack.c.l.b16 %v436
        %v1501 = vunpack.c.h.b16 %v436
        %v1502 = vunpack.c.l.b16 %v437
        %v1503 = vunpack.c.h.b16 %v437
        %v1504 = vunpack.c.l.b16 %v438
        %v1505 = vunpack.c.h.b16 %v438
        %v1506 = vunpack.c.l.b16 %v439
        %v1507 = vunpack.c.h.b16 %v439
        %v1508 = vunpack.c.l.b16 %v440
        %v1509 = vunpack.c.h.b16 %v440
        %v1510 = vunpack.c.l.b16 %v441
        %v1511 = vunpack.c.h.b16 %v441
        %v1512 = vunpack.c.l.b16 %v442
        %v1513 = vunpack.c.h.b16 %v442
        %v1514 = vunpack.c.l.b16 %v443
        %v1515 = vunpack.c.h.b16 %v443
        %v1516 = vunpack.c.l.b16 %v444
        %v1517 = vunpack.c.h.b16 %v444
        %v1518 = vunpack.c.l.b16 %v445
        %v1519 = vunpack.c.h.b16 %v445
        %v1520 = vunpack.c.l.b16 %v446
        %v1521 = vunpack.c.h.b16 %v446
        %v1522 = vunpack.c.l.b16 %v447
        %v1523 = vunpack.c.h.b16 %v447
        %v1524 = vunpack.c.l.b16 %v448
        %v1525 = vunpack.c.h.b16 %v448
        %v1526 = vunpack.c.l.b16 %v449
        %v1527 = vunpack.c.h.b16 %v449
        %v1528 = vunpack.c.l.b16 %v450
        %v1529 = vunpack.c.h.b16 %v450
        %v1530 = vunpack.c.l.b16 %v451
        %v1531 = vunpack.c.h.b16 %v451
        %v1532 = vunpack.c.l.b16 %v452
        %v1533 = vunpack.c.h.b16 %v452
        %v1534 = vunpack.c.l.b16 %v453
        %v1535 = vunpack.c.h.b16 %v453
        %v1536 = vunpack.c.l.b16 %v454
        %v1537 = vunpack.c.h.b16 %v454
        %v1538 = vunpack.c.l.b16 %v455
        %v1539 = vunpack.c.h.b16 %v455
        %v1540 = vunpack.c.l.b16 %v456
        %v1541 = vunpack.c.h.b16 %v456
        %v1542 = vunpack.c.l.b16 %v457
        %v1543 = vunpack.c.h.b16 %v457
        %v1544 = vunpack.c.l.b16 %v458
        %v1545 = vunpack.c.h.b16 %v458
        %v1546 = vunpack.c.l.b16 %v459
        %v1547 = vunpack.c.h.b16 %v459
        %v1548 = vunpack.c.l.b16 %v460
        %v1549 = vunpack.c.h.b16 %v460
        %v1550 = vunpack.c.l.b16 %v461
        %v1551 = vunpack.c.h.b16 %v461
        %v1552 = vunpack.c.l.b16 %v462
        %v1553 = vunpack.c.h.b16 %v462
        %v1554 = vunpack.c.l.b16 %v463
        %v1555 = vunpack.c.h.b16 %v463
        %v1556 = vunpack.c.l.b16 %v464
        %v1557 = vunpack.c.h.b16 %v464
        %v1558 = vunpack.c.l.b16 %v465
        %v1559 = vunpack.c.h.b16 %v465
        %v1560 = vunpack.c.l.b16 %v466
        %v1561 = vunpack.c.h.b16 %v466
        %v1562 = vunpack.c.l.b16 %v467
        %v1563 = vunpack.c.h.b16 %v467
        %v1564 = vunpack.c.l.b16 %v468
        %v1565 = vunpack.c.h.b16 %v468
        %v1566 = vunpack.c.l.b16 %v469
        %v1567 = vunpack.c.h.b16 %v469
        %v1568 = vunpack.c.l.b16 %v470
        %v1569 = vunpack.c.h.b16 %v470
        %v1570 = vunpack.c.l.b16 %v471
        %v1571 = vunpack.c.h.b16 %v471
        %v1572 = vunpack.c.l.b16 %v472
        %v1573 = vunpack.c.h.b16 %v472
        %v1574 = vunpack.c.l.b16 %v473
        %v1575 = vunpack.c.h.b16 %v473
        %v1576 = vunpack.c.l.b16 %v474
        %v1577 = vunpack.c.h.b16 %v474
        %v1578 = vunpack.c.l.b16 %v475
        %v1579 = vunpack.c.h.b16 %v475
        %v1580 = vunpack.c.l.b16 %v476
        %v1581 = vunpack.c.h.b16 %v476
        %v1582 = vunpack.c.l.b16 %v477
        %v1583 = vunpack.c.h.b16 %v477
        %v1584 = vunpack.c.l.b16 %v478
        %v1585 = vunpack.c.h.b16 %v478
        %v1586 = vunpack.c.l.b16 %v479
        %v1587 = vunpack.c.h.b16 %v479
        %v1588 = vunpack.c.l.b16 %v480
        %v1589 = vunpack.c.h.b16 %v480
        %v1590 = vunpack.c.l.b16 %v481
        %v1591 = vunpack.c.h.b16 %v481
        %v1592 = vunpack.c.l.b16 %v482
        %v1593 = vunpack.c.h.b16 %v482
        %v1594 = vunpack.c.l.b16 %v483
        %v1595 = vunpack.c.h.b16 %v483
        %v1596 = vunpack.c.l.b16 %v484
        %v1597 = vunpack.c.h.b16 %v484
        %v1598 = vunpack.c.l.b16 %v485
        %v1599 = vunpack.c.h.b16 %v485
        %v1600 = vunpack.c.l.b16 %v486
        %v1601 = vunpack.c.h.b16 %v486
        %v1602 = vunpack.c.l.b16 %v487
        %v1603 = vunpack.c.h.b16 %v487
        %v1604 = vunpack.c.l.b16 %v488
        %v1605 = vunpack.c.h.b16 %v488
        %v1606 = vunpack.c.l.b16 %v489
        %v1607 = vunpack.c.h.b16 %v489
        %v1608 = vunpack.c.l.b16 %v490
        %v1609 = vunpack.c.h.b16 %v490
        %v1610 = vunpack.c.l.b16 %v491
        %v1611 = vunpack.c.h.b16 %v491
        %v1612 = vunpack.c.l.b16 %v492
        %v1613 = vunpack.c.h.b16 %v492
        %v1614 = vunpack.c.l.b16 %v493
        %v1615 = vunpack.c.h.b16 %v493
        %v1616 = vunpack.c.l.b16 %v494
        %v1617 = vunpack.c.h.b16 %v494
        %v1618 = vunpack.c.l.b16 %v495
        %v1619 = vunpack.c.h.b16 %v495
        %v1620 = vunpack.c.l.b16 %v496
        %v1621 = vunpack.c.h.b16 %v496
        %v1622 = vunpack.c.l.b16 %v497
        %v1623 = vunpack.c.h.b16 %v497
        %v1624 = vunpack.c.l.b16 %v498
        %v1625 = vunpack.c.h.b16 %v498
        %v1626 = vunpack.c.l.b16 %v499
        %v1627 = vunpack.c.h.b16 %v499
        %v1628 = vunpack.c.l.b16 %v500
        %v1629 = vunpack.c.h.b16 %v500
        %v1630 = vunpack.c.l.b16 %v501
        %v1631 = vunpack.c.h.b16 %v501
        %v1632 = vunpack.c.l.b16 %v502
        %v1633 = vunpack.c.h.b16 %v502
        %v1634 = vunpack.c.l.b16 %v503
        %v1635 = vunpack.c.h.b16 %v503
        %v1636 = vunpack.c.l.b16 %v504
        %v1637 = vunpack.c.h.b16 %v504
        %v1638 = vunpack.c.l.b16 %v505
        %v1639 = vunpack.c.h.b16 %v505
        %v1640 = vunpack.c.l.b16 %v506
        %v1641 = vunpack.c.h.b16 %v506
        %v1642 = vunpack.c.l.b16 %v507
        %v1643 = vunpack.c.h.b16 %v507
        %v1644 = vunpack.c.l.b16 %v508
        %v1645 = vunpack.c.h.b16 %v508
        %v1646 = vunpack.c.l.b16 %v509
        %v1647 = vunpack.c.h.b16 %v509
        %v1648 = vunpack.c.l.b16 %v510
        %v1649 = vunpack.c.h.b16 %v510
        %v1650 = vunpack.c.l.b16 %v511
        %v1651 = vunpack.c.h.b16 %v511
        %v1652 = vunpack.c.l.b16 %v512
        %v1653 = vunpack.c.h.b16 %v512
        %v1654 = vunpack.c.l.b16 %v513
        %v1655 = vunpack.c.h.b16 %v513
        %v1656 = vunpack.c.l.b16 %v514
        %v1657 = vunpack.c.h.b16 %v514
        %v1658 = vunpack.c.l.b16 %v515
        %v1659 = vunpack.c.h.b16 %v515
        %v1660 = vunpack.c.l.b16 %v516
        %v1661 = vunpack.c.h.b16 %v516
        %v1662 = vunpack.c.l.b16 %v517
        %v1663 = vunpack.c.h.b16 %v517
        %v1664 = vunpack.c.l.b16 %v518
        %v1665 = vunpack.c.h.b16 %v518
        %v1666 = vunpack.c.l.b16 %v519
        %v1667 = vunpack.c.h.b16 %v519
        %v1668 = vunpack.c.l.b16 %v520
        %v1669 = vunpack.c.h.b16 %v520
        %v1670 = vunpack.c.l.b16 %v521
        %v1671 = vunpack.c.h.b16 %v521
        %v1672 = vunpack.c.l.b16 %v522
        %v1673 = vunpack.c.h.b16 %v522
        %v1674 = vunpack.c.l.b16 %v523
        %v1675 = vunpack.c.h.b16 %v523
        %v1676 = vunpack.c.l.b16 %v524
        %v1677 = vunpack.c.h.b16 %v524
        %v1678 = vunpack.c.l.b16 %v525
        %v1679 = vunpack.c.h.b16 %v525
        %v1680 = vunpack.c.l.b16 %v526
        %v1681 = vunpack.c.h.b16 %v526
        %v1682 = vunpack.c.l.b16 %v527
        %v1683 = vunpack.c.h.b16 %v527
        %v1684 = vunpack.c.l.b16 %v528
        %v1685 = vunpack.c.h.b16 %v528
        %v1686 = vunpack.c.l.b16 %v529
        %v1687 = vunpack.c.h.b16 %v529
        %v1688 = vunpack.c.l.b16 %v530
        %v1689 = vunpack.c.h.b16 %v530
        %v1690 = vunpack.c.l.b16 %v531
        %v1691 = vunpack.c.h.b16 %v531
        %v1692 = vunpack.c.l.b16 %v532
        %v1693 = vunpack.c.h.b16 %v532
        %v1694 = vunpack.c.l.b16 %v533
        %v1695 = vunpack.c.h.b16 %v533
        %v1696 = vunpack.c.l.b16 %v534
        %v1697 = vunpack.c.h.b16 %v534
        %v1698 = vunpack.c.l.b16 %v535
        %v1699 = vunpack.c.h.b16 %v535
        %v1700 = vunpack.c.l.b16 %v536
        %v1701 = vunpack.c.h.b16 %v536
        %v1702 = vunpack.c.l.b16 %v537
        %v1703 = vunpack.c.h.b16 %v537
        %v1704 = vunpack.c.l.b16 %v538
        %v1705 = vunpack.c.h.b16 %v538
        %v1706 = vunpack.c.l.b16 %v539
        %v1707 = vunpack.c.h.b16 %v539
        %v1708 = vunpack.c.l.b16 %v540
        %v1709 = vunpack.c.h.b16 %v540
        %v1710 = vunpack.c.l.b16 %v541
        %v1711 = vunpack.c.h.b16 %v541
        %v1712 = vunpack.c.l.b16 %v542
        %v1713 = vunpack.c.h.b16 %v542
        %v1714 = vunpack.c.l.b16 %v543
        %v1715 = vunpack.c.h.b16 %v543
        %v1716 = vunpack.c.l.b16 %v544
        %v1717 = vunpack.c.h.b16 %v544
        %v1718 = vunpack.c.l.b16 %v545
        %v1719 = vunpack.c.h.b16 %v545
        %v1720 = vunpack.c.l.b16 %v546
        %v1721 = vunpack.c.h.b16 %v546
        %v1722 = vunpack.c.l.b16 %v547
        %v1723 = vunpack.c.h.b16 %v547
        %v1724 = vunpack.c.l.b16 %v548
        %v1725 = vunpack.c.h.b16 %v548
        %v1726 = vunpack.c.l.b16 %v549
        %v1727 = vunpack.c.h.b16 %v549
        %v1728 = vunpack.c.l.b16 %v550
        %v1729 = vunpack.c.h.b16 %v550
        %v1730 = vunpack.c.l.b16 %v551
        %v1731 = vunpack.c.h.b16 %v551
        %v1732 = vunpack.c.l.b16 %v552
        %v1733 = vunpack.c.h.b16 %v552
        %v1734 = vunpack.c.l.b16 %v553
        %v1735 = vunpack.c.h.b16 %v553
        %v1736 = vunpack.c.l.b16 %v554
        %v1737 = vunpack.c.h.b16 %v554
        %v1738 = vunpack.c.l.b16 %v555
        %v1739 = vunpack.c.h.b16 %v555
        %v1740 = vunpack.c.l.b16 %v556
        %v1741 = vunpack.c.h.b16 %v556
        %v1742 = vunpack.c.l.b16 %v557
        %v1743 = vunpack.c.h.b16 %v557
        %v1744 = vunpack.c.l.b16 %v558
        %v1745 = vunpack.c.h.b16 %v558
        %v1746 = vunpack.c.l.b16 %v559
        %v1747 = vunpack.c.h.b16 %v559
        %v1748 = vunpack.c.l.b16 %v560
        %v1749 = vunpack.c.h.b16 %v560
        %v1750 = vunpack.c.l.b16 %v561
        %v1751 = vunpack.c.h.b16 %v561
        %v1752 = vunpack.c.l.b16 %v562
        %v1753 = vunpack.c.h.b16 %v562
        %v1754 = vunpack.c.l.b16 %v563
        %v1755 = vunpack.c.h.b16 %v563
        %v1756 = vunpack.c.l.b16 %v564
        %v1757 = vunpack.c.h.b16 %v564
        %v1758 = vunpack.c.l.b16 %v565
        %v1759 = vunpack.c.h.b16 %v565
        %v1760 = vunpack.c.l.b16 %v566
        %v1761 = vunpack.c.h.b16 %v566
        %v1762 = vunpack.c.l.b16 %v567
        %v1763 = vunpack.c.h.b16 %v567
        %v1764 = vunpack.c.l.b16 %v568
        %v1765 = vunpack.c.h.b16 %v568
        %v1766 = vunpack.c.l.b16 %v569
        %v1767 = vunpack.c.h.b16 %v569
        %v1768 = vunpack.c.l.b16 %v570
        %v1769 = vunpack.c.h.b16 %v570
        %v1770 = vunpack.c.l.b16 %v571
        %v1771 = vunpack.c.h.b16 %v571
        %v1772 = vunpack.c.l.b16 %v572
        %v1773 = vunpack.c.h.b16 %v572
        %v1774 = vunpack.c.l.b16 %v573
        %v1775 = vunpack.c.h.b16 %v573
        %v1776 = vunpack.c.l.b16 %v574
        %v1777 = vunpack.c.h.b16 %v574
        %v1778 = vunpack.c.l.b16 %v575
        %v1779 = vunpack.c.h.b16 %v575
        %v1780 = vunpack.c.l.b16 %v576
        %v1781 = vunpack.c.h.b16 %v576
        %v1782 = vunpack.c.l.b16 %v577
        %v1783 = vunpack.c.h.b16 %v577
        %v1784 = vunpack.c.l.b16 %v578
        %v1785 = vunpack.c.h.b16 %v578
        %v1786 = vunpack.c.l.b16 %v579
        %v1787 = vunpack.c.h.b16 %v579
        %v1788 = vunpack.c.l.b16 %v580
        %v1789 = vunpack.c.h.b16 %v580
        %v1790 = vunpack.c.l.b16 %v581
        %v1791 = vunpack.c.h.b16 %v581
        %v1792 = vunpack.c.l.b16 %v582
        %v1793 = vunpack.c.h.b16 %v582
        %v1794 = vunpack.c.l.b16 %v583
        %v1795 = vunpack.c.h.b16 %v583
        %v1796 = vunpack.c.l.b16 %v584
        %v1797 = vunpack.c.h.b16 %v584
        %v1798 = vunpack.c.l.b16 %v585
        %v1799 = vunpack.c.h.b16 %v585
        %v1800 = vunpack.c.l.b16 %v586
        %v1801 = vunpack.c.h.b16 %v586
        %v1802 = vunpack.c.l.b16 %v587
        %v1803 = vunpack.c.h.b16 %v587
        %v1804 = vunpack.c.l.b16 %v588
        %v1805 = vunpack.c.h.b16 %v588
        %v1806 = vunpack.c.l.b16 %v589
        %v1807 = vunpack.c.h.b16 %v589
        %v1808 = vunpack.c.l.b16 %v590
        %v1809 = vunpack.c.h.b16 %v590
        %v1810 = vunpack.c.l.b16 %v591
        %v1811 = vunpack.c.h.b16 %v591
        %v1812 = vunpack.c.l.b16 %v592
        %v1813 = vunpack.c.h.b16 %v592
        %v1814 = vunpack.c.l.b16 %v593
        %v1815 = vunpack.c.h.b16 %v593
        %v1816 = vunpack.c.l.b16 %v594
        %v1817 = vunpack.c.h.b16 %v594
        %v1818 = vunpack.c.l.b16 %v595
        %v1819 = vunpack.c.h.b16 %v595
        %v1820 = vunpack.c.l.b16 %v596
        %v1821 = vunpack.c.h.b16 %v596
        %v1822 = vunpack.c.l.b16 %v597
        %v1823 = vunpack.c.h.b16 %v597
        %v1824 = vunpack.c.l.b16 %v598
        %v1825 = vunpack.c.h.b16 %v598
        %v1826 = vunpack.c.l.b16 %v599
        %v1827 = vunpack.c.h.b16 %v599
        %v1828 = vunpack.c.l.b16 %v600
        %v1829 = vunpack.c.h.b16 %v600
        %v1830 = vunpack.c.l.b16 %v601
        %v1831 = vunpack.c.h.b16 %v601
        %v1832 = vunpack.c.l.b16 %v602
        %v1833 = vunpack.c.h.b16 %v602
        %v1834 = vunpack.c.l.b16 %v603
        %v1835 = vunpack.c.h.b16 %v603
        %v1836 = vunpack.c.l.b16 %v604
        %v1837 = vunpack.c.h.b16 %v604
        %v1838 = vunpack.c.l.b16 %v605
        %v1839 = vunpack.c.h.b16 %v605
        %v1840 = vunpack.c.l.b16 %v606
        %v1841 = vunpack.c.h.b16 %v606
        %v1842 = vunpack.c.l.b16 %v607
        %v1843 = vunpack.c.h.b16 %v607
        %v1844 = vunpack.c.l.b16 %v608
        %v1845 = vunpack.c.h.b16 %v608
        %v1846 = vunpack.c.l.b16 %v609
        %v1847 = vunpack.c.h.b16 %v609
        %v1848 = vunpack.c.l.b16 %v610
        %v1849 = vunpack.c.h.b16 %v610
        %v1850 = vunpack.c.l.b16 %v611
        %v1851 = vunpack.c.h.b16 %v611
        %v1852 = vunpack.c.l.b16 %v612
        %v1853 = vunpack.c.h.b16 %v612
        %v1854 = vunpack.c.l.b16 %v613
        %v1855 = vunpack.c.h.b16 %v613
        %v1856 = vunpack.c.l.b16 %v614
        %v1857 = vunpack.c.h.b16 %v614
        %v1858 = vunpack.c.l.b16 %v615
        %v1859 = vunpack.c.h.b16 %v615
        %v1860 = vunpack.c.l.b16 %v616
        %v1861 = vunpack.c.h.b16 %v616
        %v1862 = vunpack.c.l.b16 %v617
        %v1863 = vunpack.c.h.b16 %v617
        %v1864 = vunpack.c.l.b16 %v618
        %v1865 = vunpack.c.h.b16 %v618
        %v1866 = vunpack.c.l.b16 %v619
        %v1867 = vunpack.c.h.b16 %v619
        %v1868 = vunpack.c.l.b16 %v620
        %v1869 = vunpack.c.h.b16 %v620
        %v1870 = vunpack.c.l.b16 %v621
        %v1871 = vunpack.c.h.b16 %v621
        %v1872 = vunpack.c.l.b16 %v622
        %v1873 = vunpack.c.h.b16 %v622
        %v1874 = vunpack.c.l.b16 %v623
        %v1875 = vunpack.c.h.b16 %v623
        %v1876 = vunpack.c.l.b16 %v624
        %v1877 = vunpack.c.h.b16 %v624
        %v1878 = vunpack.c.l.b16 %v625
        %v1879 = vunpack.c.h.b16 %v625
        %v1880 = vunpack.c.l.b16 %v626
        %v1881 = vunpack.c.h.b16 %v626
        %v1882 = vunpack.c.l.b16 %v627
        %v1883 = vunpack.c.h.b16 %v627
        %v1884 = vunpack.c.l.b16 %v628
        %v1885 = vunpack.c.h.b16 %v628
        %v1886 = vunpack.c.l.b16 %v629
        %v1887 = vunpack.c.h.b16 %v629
        %v1888 = vunpack.c.l.b16 %v630
        %v1889 = vunpack.c.h.b16 %v630
        %v1890 = vunpack.c.l.b16 %v631
        %v1891 = vunpack.c.h.b16 %v631
        %v1892 = vunpack.c.l.b16 %v632
        %v1893 = vunpack.c.h.b16 %v632
        %v1894 = vunpack.c.l.b16 %v633
        %v1895 = vunpack.c.h.b16 %v633
        %v1896 = vunpack.c.l.b16 %v634
        %v1897 = vunpack.c.h.b16 %v634
        %v1898 = vunpack.c.l.b16 %v635
        %v1899 = vunpack.c.h.b16 %v635
        %v1900 = vpack.c.b16 %v1138, %v1132
        %v1901 = vpack.c.b16 %v1139, %v1133
        %v1902 = vpack.c.b16 %v1140, %v1134
        %v1903 = vpack.c.b16 %v1141, %v1135
        %v1904 = vpack.c.b16 %v1142, %v1136
        %v1905 = vpack.c.b16 %v1143, %v1137
        %v1906 = vpack.c.b16 %v1150, %v1144
        %v1907 = vpack.c.b16 %v1151, %v1145
        %v1908 = vpack.c.b16 %v1152, %v1146
        %v1909 = vpack.c.b16 %v1153, %v1147
        %v1910 = vpack.c.b16 %v1154, %v1148
        %v1911 = vpack.c.b16 %v1155, %v1149
        %v1912 = vpack.c.b16 %v1162, %v1156
        %v1913 = vpack.c.b16 %v1163, %v1157
        %v1914 = vpack.c.b16 %v1164, %v1158
        %v1915 = vpack.c.b16 %v1165, %v1159
        %v1916 = vpack.c.b16 %v1166, %v1160
        %v1917 = vpack.c.b16 %v1167, %v1161
        %v1918 = vpack.c.b16 %v1174, %v1168
        %v1919 = vpack.c.b16 %v1175, %v1169
        %v1920 = vpack.c.b16 %v1176, %v1170
        %v1921 = vpack.c.b16 %v1177, %v1171
        %v1922 = vpack.c.b16 %v1178, %v1172
        %v1923 = vpack.c.b16 %v1179, %v1173
        %v1924 = vpack.c.b16 %v1186, %v1180
        %v1925 = vpack.c.b16 %v1187, %v1181
        %v1926 = vpack.c.b16 %v1188, %v1182
        %v1927 = vpack.c.b16 %v1189, %v1183
        %v1928 = vpack.c.b16 %v1190, %v1184
        %v1929 = vpack.c.b16 %v1191, %v1185
        %v1930 = vpack.c.b16 %v1198, %v1192
        %v1931 = vpack.c.b16 %v1199, %v1193
        %v1932 = vpack.c.b16 %v1200, %v1194
        %v1933 = vpack.c.b16 %v1201, %v1195
        %v1934 = vpack.c.b16 %v1202, %v1196
        %v1935 = vpack.c.b16 %v1203, %v1197
        %v1936 = vpack.c.b16 %v1210, %v1204
        %v1937 = vpack.c.b16 %v1211, %v1205
        %v1938 = vpack.c.b16 %v1212, %v1206
        %v1939 = vpack.c.b16 %v1213, %v1207
        %v1940 = vpack.c.b16 %v1214, %v1208
        %v1941 = vpack.c.b16 %v1215, %v1209
        %v1942 = vpack.c.b16 %v1222, %v1216
        %v1943 = vpack.c.b16 %v1223, %v1217
        %v1944 = vpack.c.b16 %v1224, %v1218
        %v1945 = vpack.c.b16 %v1225, %v1219
        %v1946 = vpack.c.b16 %v1226, %v1220
        %v1947 = vpack.c.b16 %v1227, %v1221
        %v1948 = vpack.c.b16 %v1234, %v1228
        %v1949 = vpack.c.b16 %v1235, %v1229
        %v1950 = vpack.c.b16 %v1236, %v1230
        %v1951 = vpack.c.b16 %v1237, %v1231
        %v1952 = vpack.c.b16 %v1238, %v1232
        %v1953 = vpack.c.b16 %v1239, %v1233
        %v1954 = vpack.c.b16 %v1246, %v1240
        %v1955 = vpack.c.b16 %v1247, %v1241
        %v1956 = vpack.c.b16 %v1248, %v1242
        %v1957 = vpack.c.b16 %v1249, %v1243
        %v1958 = vpack.c.b16 %v1250, %v1244
        %v1959 = vpack.c.b16 %v1251, %v1245
        %v1960 = vpack.c.b16 %v1258, %v1252
        %v1961 = vpack.c.b16 %v1259, %v1253
        %v1962 = vpack.c.b16 %v1260, %v1254
        %v1963 = vpack.c.b16 %v1261, %v1255
        %v1964 = vpack.c.b16 %v1262, %v1256
        %v1965 = vpack.c.b16 %v1263, %v1257
        %v1966 = vpack.c.b16 %v1270, %v1264
        %v1967 = vpack.c.b16 %v1271, %v1265
        %v1968 = vpack.c.b16 %v1272, %v1266
        %v1969 = vpack.c.b16 %v1273, %v1267
        %v1970 = vpack.c.b16 %v1274, %v1268
        %v1971 = vpack.c.b16 %v1275, %v1269
        %v1972 = vpack.c.b16 %v1282, %v1276
        %v1973 = vpack.c.b16 %v1283, %v1277
        %v1974 = vpack.c.b16 %v1284, %v1278
        %v1975 = vpack.c.b16 %v1285, %v1279
        %v1976 = vpack.c.b16 %v1286, %v1280
        %v1977 = vpack.c.b16 %v1287, %v1281
        %v1978 = vpack.c.b16 %v1294, %v1288
        %v1979 = vpack.c.b16 %v1295, %v1289
        %v1980 = vpack.c.b16 %v1296, %v1290
        %v1981 = vpack.c.b16 %v1297, %v1291
        %v1982 = vpack.c.b16 %v1298, %v1292
        %v1983 = vpack.c.b16 %v1299, %v1293
        %v1984 = vpack.c.b16 %v1306, %v1300
        %v1985 = vpack.c.b16 %v1307, %v1301
        %v1986 = vpack.c.b16 %v1308, %v1302
        %v1987 = vpack.c.b16 %v1309, %v1303
        %v1988 = vpack.c.b16 %v1310, %v1304
        %v1989 = vpack.c.b16 %v1311, %v1305
        %v1990 = vpack.c.b16 %v1318, %v1312
        %v1991 = vpack.c.b16 %v1319, %v1313
        %v1992 = vpack.c.b16 %v1320, %v1314
        %v1993 = vpack.c.b16 %v1321, %v1315
        %v1994 = vpack.c.b16 %v1322, %v1316
        %v1995 = vpack.c.b16 %v1323, %v1317
        %v1996 = vpack.c.b16 %v1330, %v1324
        %v1997 = vpack.c.b16 %v1331, %v1325
        %v1998 = vpack.c.b16 %v1332, %v1326
        %v1999 = vpack.c.b16 %v1333, %v1327
        %v2000 = vpack.c.b16 %v1334, %v1328
        %v2001 = vpack.c.b16 %v1335, %v1329
        %v2002 = vpack.c.b16 %v1342, %v1336
        %v2003 = vpack.c.b16 %v1343, %v1337
        %v2004 = vpack.c.b16 %v1344, %v1338
        %v2005 = vpack.c.b16 %v1345, %v1339
        %v2006 = vpack.c.b16 %v1346, %v1340
        %v2007 = vpack.c.b16 %v1347, %v1341
        %v2008 = vpack.c.b16 %v1354, %v1348
        %v2009 = vpack.c.b16 %v1355, %v1349
        %v2010 = vpack.c.b16 %v1356, %v1350
        %v2011 = vpack.c.b16 %v1357, %v1351
        %v2012 = vpack.c.b16 %v1358, %v1352
        %v2013 = vpack.c.b16 %v1359, %v1353
        %v2014 = vpack.c.b16 %v1366, %v1360
        %v2015 = vpack.c.b16 %v1367, %v1361
        %v2016 = vpack.c.b16 %v1368, %v1362
        %v2017 = vpack.c.b16 %v1369, %v1363
        %v2018 = vpack.c.b16 %v1370, %v1364
        %v2019 = vpack.c.b16 %v1371, %v1365
        %v2020 = vpack.c.b16 %v1378, %v1372
        %v2021 = vpack.c.b16 %v1379, %v1373
        %v2022 = vpack.c.b16 %v1380, %v1374
        %v2023 = vpack.c.b16 %v1381, %v1375
        %v2024 = vpack.c.b16 %v1382, %v1376
        %v2025 = vpack.c.b16 %v1383, %v1377
        %v2026 = vpack.c.b16 %v1390, %v1384
        %v2027 = vpack.c.b16 %v1391, %v1385
        %v2028 = vpack.c.b16 %v1392, %v1386
        %v2029 = vpack.c.b16 %v1393, %v1387
        %v2030 = vpack.c.b16 %v1394, %v1388
        %v2031 = vpack.c.b16 %v1395, %v1389
        %v2032 = vpack.c.b16 %v1402, %v1396
        %v2033 = vpack.c.b16 %v1403, %v1397
        %v2034 = vpack.c.b16 %v1404, %v1398
        %v2035 = vpack.c.b16 %v1405, %v1399
        %v2036 = vpack.c.b16 %v1406, %v1400
        %v2037 = vpack.c.b16 %v1407, %v1401
        %v2038 = vpack.c.b16 %v1414, %v1408
        %v2039 = vpack.c.b16 %v1415, %v1409
        %v2040 = vpack.c.b16 %v1416, %v1410
        %v2041 = vpack.c.b16 %v1417, %v1411
        %v2042 = vpack.c.b16 %v1418, %v1412
        %v2043 = vpack.c.b16 %v1419, %v1413
        %v2044 = vpack.c.b16 %v1426, %v1420
        %v2045 = vpack.c.b16 %v1427, %v1421
        %v2046 = vpack.c.b16 %v1428, %v1422
        %v2047 = vpack.c.b16 %v1429, %v1423
        %v2048 = vpack.c.b16 %v1430, %v1424
        %v2049 = vpack.c.b16 %v1431, %v1425
        %v2050 = vpack.c.b16 %v1438, %v1432
        %v2051 = vpack.c.b16 %v1439, %v1433
        %v2052 = vpack.c.b16 %v1440, %v1434
        %v2053 = vpack.c.b16 %v1441, %v1435
        %v2054 = vpack.c.b16 %v1442, %v1436
        %v2055 = vpack.c.b16 %v1443, %v1437
        %v2056 = vpack.c.b16 %v1450, %v1444
        %v2057 = vpack.c.b16 %v1451, %v1445
        %v2058 = vpack.c.b16 %v1452, %v1446
        %v2059 = vpack.c.b16 %v1453, %v1447
        %v2060 = vpack.c.b16 %v1454, %v1448
        %v2061 = vpack.c.b16 %v1455, %v1449
        %v2062 = vpack.c.b16 %v1462, %v1456
        %v2063 = vpack.c.b16 %v1463, %v1457
        %v2064 = vpack.c.b16 %v1464, %v1458
        %v2065 = vpack.c.b16 %v1465, %v1459
        %v2066 = vpack.c.b16 %v1466, %v1460
        %v2067 = vpack.c.b16 %v1467, %v1461
        %v2068 = vpack.c.b16 %v1474, %v1468
        %v2069 = vpack.c.b16 %v1475, %v1469
        %v2070 = vpack.c.b16 %v1476, %v1470
        %v2071 = vpack.c.b16 %v1477, %v1471
        %v2072 = vpack.c.b16 %v1478, %v1472
        %v2073 = vpack.c.b16 %v1479, %v1473
        %v2074 = vpack.c.b16 %v1486, %v1480
        %v2075 = vpack.c.b16 %v1487, %v1481
        %v2076 = vpack.c.b16 %v1488, %v1482
        %v2077 = vpack.c.b16 %v1489, %v1483
        %v2078 = vpack.c.b16 %v1490, %v1484
        %v2079 = vpack.c.b16 %v1491, %v1485
        %v2080 = vpack.c.b16 %v1498, %v1492
        %v2081 = vpack.c.b16 %v1499, %v1493
        %v2082 = vpack.c.b16 %v1500, %v1494
        %v2083 = vpack.c.b16 %v1501, %v1495
        %v2084 = vpack.c.b16 %v1502, %v1496
        %v2085 = vpack.c.b16 %v1503, %v1497
        %v2086 = vpack.c.b16 %v1510, %v1504
        %v2087 = vpack.c.b16 %v1511, %v1505
        %v2088 = vpack.c.b16 %v1512, %v1506
        %v2089 = vpack.c.b16 %v1513, %v1507
        %v2090 = vpack.c.b16 %v1514, %v1508
        %v2091 = vpack.c.b16 %v1515, %v1509
        %v2092 = vpack.c.b16 %v1522, %v1516
        %v2093 = vpack.c.b16 %v1523, %v1517
        %v2094 = vpack.c.b16 %v1524, %v1518
        %v2095 = vpack.c.b16 %v1525, %v1519
        %v2096 = vpack.c.b16 %v1526, %v1520
        %v2097 = vpack.c.b16 %v1527, %v1521
        %v2098 = vpack.c.b16 %v1534, %v1528
        %v2099 = vpack.c.b16 %v1535, %v1529
        %v2100 = vpack.c.b16 %v1536, %v1530
        %v2101 = vpack.c.b16 %v1537, %v1531
        %v2102 = vpack.c.b16 %v1538, %v1532
        %v2103 = vpack.c.b16 %v1539, %v1533
        %v2104 = vpack.c.b16 %v1546, %v1540
        %v2105 = vpack.c.b16 %v1547, %v1541
        %v2106 = vpack.c.b16 %v1548, %v1542
        %v2107 = vpack.c.b16 %v1549, %v1543
        %v2108 = vpack.c.b16 %v1550, %v1544
        %v2109 = vpack.c.b16 %v1551, %v1545
        %v2110 = vpack.c.b16 %v1558, %v1552
        %v2111 = vpack.c.b16 %v1559, %v1553
        %v2112 = vpack.c.b16 %v1560, %v1554
        %v2113 = vpack.c.b16 %v1561, %v1555
        %v2114 = vpack.c.b16 %v1562, %v1556
        %v2115 = vpack.c.b16 %v1563, %v1557
        %v2116 = vpack.c.b16 %v1570, %v1564
        %v2117 = vpack.c.b16 %v1571, %v1565
        %v2118 = vpack.c.b16 %v1572, %v1566
        %v2119 = vpack.c.b16 %v1573, %v1567
        %v2120 = vpack.c.b16 %v1574, %v1568
        %v2121 = vpack.c.b16 %v1575, %v1569
        %v2122 = vpack.c.b16 %v1582, %v1576
        %v2123 = vpack.c.b16 %v1583, %v1577
        %v2124 = vpack.c.b16 %v1584, %v1578
        %v2125 = vpack.c.b16 %v1585, %v1579
        %v2126 = vpack.c.b16 %v1586, %v1580
        %v2127 = vpack.c.b16 %v1587, %v1581
        %v2128 = vpack.c.b16 %v1594, %v1588
        %v2129 = vpack.c.b16 %v1595, %v1589
        %v2130 = vpack.c.b16 %v1596, %v1590
        %v2131 = vpack.c.b16 %v1597, %v1591
        %v2132 = vpack.c.b16 %v1598, %v1592
        %v2133 = vpack.c.b16 %v1599, %v1593
        %v2134 = vpack.c.b16 %v1606, %v1600
        %v2135 = vpack.c.b16 %v1607, %v1601
        %v2136 = vpack.c.b16 %v1608, %v1602
        %v2137 = vpack.c.b16 %v1609, %v1603
        %v2138 = vpack.c.b16 %v1610, %v1604
        %v2139 = vpack.c.b16 %v1611, %v1605
        %v2140 = vpack.c.b16 %v1618, %v1612
        %v2141 = vpack.c.b16 %v1619, %v1613
        %v2142 = vpack.c.b16 %v1620, %v1614
        %v2143 = vpack.c.b16 %v1621, %v1615
        %v2144 = vpack.c.b16 %v1622, %v1616
        %v2145 = vpack.c.b16 %v1623, %v1617
        %v2146 = vpack.c.b16 %v1630, %v1624
        %v2147 = vpack.c.b16 %v1631, %v1625
        %v2148 = vpack.c.b16 %v1632, %v1626
        %v2149 = vpack.c.b16 %v1633, %v1627
        %v2150 = vpack.c.b16 %v1634, %v1628
        %v2151 = vpack.c.b16 %v1635, %v1629
        %v2152 = vpack.c.b16 %v1642, %v1636
        %v2153 = vpack.c.b16 %v1643, %v1637
        %v2154 = vpack.c.b16 %v1644, %v1638
        %v2155 = vpack.c.b16 %v1645, %v1639
        %v2156 = vpack.c.b16 %v1646, %v1640
        %v2157 = vpack.c.b16 %v1647, %v1641
        %v2158 = vpack.c.b16 %v1654, %v1648
        %v2159 = vpack.c.b16 %v1655, %v1649
        %v2160 = vpack.c.b16 %v1656, %v1650
        %v2161 = vpack.c.b16 %v1657, %v1651
        %v2162 = vpack.c.b16 %v1658, %v1652
        %v2163 = vpack.c.b16 %v1659, %v1653
        %v2164 = vpack.c.b16 %v1666, %v1660
        %v2165 = vpack.c.b16 %v1667, %v1661
        %v2166 = vpack.c.b16 %v1668, %v1662
        %v2167 = vpack.c.b16 %v1669, %v1663
        %v2168 = vpack.c.b16 %v1670, %v1664
        %v2169 = vpack.c.b16 %v1671, %v1665
        %v2170 = vpack.c.b16 %v1678, %v1672
        %v2171 = vpack.c.b16 %v1679, %v1673
        %v2172 = vpack.c.b16 %v1680, %v1674
        %v2173 = vpack.c.b16 %v1681, %v1675
        %v2174 = vpack.c.b16 %v1682, %v1676
        %v2175 = vpack.c.b16 %v1683, %v1677
        %v2176 = vpack.c.b16 %v1690, %v1684
        %v2177 = vpack.c.b16 %v1691, %v1685
        %v2178 = vpack.c.b16 %v1692, %v1686
        %v2179 = vpack.c.b16 %v1693, %v1687
        %v2180 = vpack.c.b16 %v1694, %v1688
        %v2181 = vpack.c.b16 %v1695, %v1689
        %v2182 = vpack.c.b16 %v1702, %v1696
        %v2183 = vpack.c.b16 %v1703, %v1697
        %v2184 = vpack.c.b16 %v1704, %v1698
        %v2185 = vpack.c.b16 %v1705, %v1699
        %v2186 = vpack.c.b16 %v1706, %v1700
        %v2187 = vpack.c.b16 %v1707, %v1701
        %v2188 = vpack.c.b16 %v1714, %v1708
        %v2189 = vpack.c.b16 %v1715, %v1709
        %v2190 = vpack.c.b16 %v1716, %v1710
        %v2191 = vpack.c.b16 %v1717, %v1711
        %v2192 = vpack.c.b16 %v1718, %v1712
        %v2193 = vpack.c.b16 %v1719, %v1713
        %v2194 = vpack.c.b16 %v1726, %v1720
        %v2195 = vpack.c.b16 %v1727, %v1721
        %v2196 = vpack.c.b16 %v1728, %v1722
        %v2197 = vpack.c.b16 %v1729, %v1723
        %v2198 = vpack.c.b16 %v1730, %v1724
        %v2199 = vpack.c.b16 %v1731, %v1725
        %v2200 = vpack.c.b16 %v1738, %v1732
        %v2201 = vpack.c.b16 %v1739, %v1733
        %v2202 = vpack.c.b16 %v1740, %v1734
        %v2203 = vpack.c.b16 %v1741, %v1735
        %v2204 = vpack.c.b16 %v1742, %v1736
        %v2205 = vpack.c.b16 %v1743, %v1737
        %v2206 = vpack.c.b16 %v1750, %v1744
        %v2207 = vpack.c.b16 %v1751, %v1745
        %v2208 = vpack.c.b16 %v1752, %v1746
        %v2209 = vpack.c.b16 %v1753, %v1747
        %v2210 = vpack.c.b16 %v1754, %v1748
        %v2211 = vpack.c.b16 %v1755, %v1749
        %v2212 = vpack.c.b16 %v1762, %v1756
        %v2213 = vpack.c.b16 %v1763, %v1757
        %v2214 = vpack.c.b16 %v1764, %v1758
        %v2215 = vpack.c.b16 %v1765, %v1759
        %v2216 = vpack.c.b16 %v1766, %v1760
        %v2217 = vpack.c.b16 %v1767, %v1761
        %v2218 = vpack.c.b16 %v1774, %v1768
        %v2219 = vpack.c.b16 %v1775, %v1769
        %v2220 = vpack.c.b16 %v1776, %v1770
        %v2221 = vpack.c.b16 %v1777, %v1771
        %v2222 = vpack.c.b16 %v1778, %v1772
        %v2223 = vpack.c.b16 %v1779, %v1773
        %v2224 = vpack.c.b16 %v1786, %v1780
        %v2225 = vpack.c.b16 %v1787, %v1781
        %v2226 = vpack.c.b16 %v1788, %v1782
        %v2227 = vpack.c.b16 %v1789, %v1783
        %v2228 = vpack.c.b16 %v1790, %v1784
        %v2229 = vpack.c.b16 %v1791, %v1785
        %v2230 = vpack.c.b16 %v1798, %v1792
        %v2231 = vpack.c.b16 %v1799, %v1793
        %v2232 = vpack.c.b16 %v1800, %v1794
        %v2233 = vpack.c.b16 %v1801, %v1795
        %v2234 = vpack.c.b16 %v1802, %v1796
        %v2235 = vpack.c.b16 %v1803, %v1797
        %v2236 = vpack.c.b16 %v1810, %v1804
        %v2237 = vpack.c.b16 %v1811, %v1805
        %v2238 = vpack.c.b16 %v1812, %v1806
        %v2239 = vpack.c.b16 %v1813, %v1807
        %v2240 = vpack.c.b16 %v1814, %v1808
        %v2241 = vpack.c.b16 %v1815, %v1809
        %v2242 = vpack.c.b16 %v1822, %v1816
        %v2243 = vpack.c.b16 %v1823, %v1817
        %v2244 = vpack.c.b16 %v1824, %v1818
        %v2245 = vpack.c.b16 %v1825, %v1819
        %v2246 = vpack.c.b16 %v1826, %v1820
        %v2247 = vpack.c.b16 %v1827, %v1821
        %v2248 = vpack.c.b16 %v1834, %v1828
        %v2249 = vpack.c.b16 %v1835, %v1829
        %v2250 = vpack.c.b16 %v1836, %v1830
        %v2251 = vpack.c.b16 %v1837, %v1831
        %v2252 = vpack.c.b16 %v1838, %v1832
        %v2253 = vpack.c.b16 %v1839, %v1833
        %v2254 = vpack.c.b16 %v1846, %v1840
        %v2255 = vpack.c.b16 %v1847, %v1841
        %v2256 = vpack.c.b16 %v1848, %v1842
        %v2257 = vpack.c.b16 %v1849, %v1843
        %v2258 = vpack.c.b16 %v1850, %v1844
        %v2259 = vpack.c.b16 %v1851, %v1845
        %v2260 = vpack.c.b16 %v1858, %v1852
        %v2261 = vpack.c.b16 %v1859, %v1853
        %v2262 = vpack.c.b16 %v1860, %v1854
        %v2263 = vpack.c.b16 %v1861, %v1855
        %v2264 = vpack.c.b16 %v1862, %v1856
        %v2265 = vpack.c.b16 %v1863, %v1857
        %v2266 = vpack.c.b16 %v1870, %v1864
        %v2267 = vpack.c.b16 %v1871, %v1865
        %v2268 = vpack.c.b16 %v1872, %v1866
        %v2269 = vpack.c.b16 %v1873, %v1867
        %v2270 = vpack.c.b16 %v1874, %v1868
        %v2271 = vpack.c.b16 %v1875, %v1869
        %v2272 = vpack.c.b16 %v1882, %v1876
        %v2273 = vpack.c.b16 %v1883, %v1877
        %v2274 = vpack.c.b16 %v1884, %v1878
        %v2275 = vpack.c.b16 %v1885, %v1879
        %v2276 = vpack.c.b16 %v1886, %v1880
        %v2277 = vpack.c.b16 %v1887, %v1881
        %v2278 = vpack.c.b16 %v1894, %v1888
        %v2279 = vpack.c.b16 %v1895, %v1889
        %v2280 = vpack.c.b16 %v1896, %v1890
        %v2281 = vpack.c.b16 %v1897, %v1891
        %v2282 = vpack.c.b16 %v1898, %v1892
        %v2283 = vpack.c.b16 %v1899, %v1893
        %2668 = vmatprep.subr.bf16.mxu0 %v1901
        %2669 = vmatpush1.bf16.msra.mxu0 %v1900
        %2670 = vmatprep.subr.bf16.mxu0 %v1907
        %2671 = vmatpush1.bf16.msra.mxu0 %v1906
        %2672 = vmatprep.subr.bf16.mxu0 %v1913
        %2673 = vmatpush1.bf16.msra.mxu0 %v1912
        %2674 = vmatprep.subr.bf16.mxu0 %v1919
        %2675 = vmatpush1.bf16.msra.mxu0 %v1918
        %2676 = vmatprep.subr.bf16.mxu0 %v1925
        %2677 = vmatpush1.bf16.msra.mxu0 %v1924
        %2678 = vmatprep.subr.bf16.mxu0 %v1931
        %2679 = vmatpush1.bf16.msra.mxu0 %v1930
        %2680 = vmatprep.subr.bf16.mxu0 %v1937
        %2681 = vmatpush1.bf16.msra.mxu0 %v1936
        %2682 = vmatprep.subr.bf16.mxu0 %v1943
        %2683 = vmatpush1.bf16.msra.mxu0 %v1942
        %2684 = vmatprep.subr.bf16.mxu0 %v1949
        %2685 = vmatpush1.bf16.msra.mxu0 %v1948
        %2686 = vmatprep.subr.bf16.mxu0 %v1955
        %2687 = vmatpush1.bf16.msra.mxu0 %v1954
        %2688 = vmatprep.subr.bf16.mxu0 %v1961
        %2689 = vmatpush1.bf16.msra.mxu0 %v1960
        %2690 = vmatprep.subr.bf16.mxu0 %v1967
        %2691 = vmatpush1.bf16.msra.mxu0 %v1966
        %2692 = vmatprep.subr.bf16.mxu0 %v1973
        %2693 = vmatpush1.bf16.msra.mxu0 %v1972
        %2694 = vmatprep.subr.bf16.mxu0 %v1979
        %2695 = vmatpush1.bf16.msra.mxu0 %v1978
        %2696 = vmatprep.subr.bf16.mxu0 %v1985
        %2697 = vmatpush1.bf16.msra.mxu0 %v1984
        %2698 = vmatprep.subr.bf16.mxu0 %v1991
        %2699 = vmatpush1.bf16.msra.mxu0 %v1990
        %2700 = vmatprep.mubr.bf16.mxu0 %v717
        %2701 = vmatmul.mubr.bf16.gmra.mrb[0].mxu0 %v716
        %v2702 = vpop.f32.mrb[0].mxu0
        %v2703 = vadd.f32 %v641, %v2702
        %v2704 = vpop.f32.mrb[0].mxu0
        %v2705 = vadd.f32 %v645, %v2704
        %v2706 = vpop.f32.mrb[0].mxu0
        %v2707 = vadd.f32 %v641, %v2706
        %v2708 = vpop.f32.mrb[0].mxu0
        %v2709 = vadd.f32 %v645, %v2708
        %2710 = vmatprep.mubr.bf16.mxu0 %v725
        %2711 = vmatmul.mubr.bf16.gmra.mrb[0].mxu0 %v724
        %v2712 = vpop.f32.mrb[0].mxu0
        %v2713 = vadd.f32 %v641, %v2712
        %v2714 = vpop.f32.mrb[0].mxu0
        %v2715 = vadd.f32 %v645, %v2714
        %v2716 = vpop.f32.mrb[0].mxu0
        %v2717 = vadd.f32 %v641, %v2716
        %v2718 = vpop.f32.mrb[0].mxu0
        %v2719 = vadd.f32 %v645, %v2718
        %2720 = vdwg.mxu0
        %2721 = vmatprep.subr.bf16.mxu0 %v1997
        %2722 = vmatpush1.bf16.msra.mxu0 %v1996
        %2723 = vmatprep.subr.bf16.mxu0 %v2003
        %2724 = vmatpush1.bf16.msra.mxu0 %v2002
        %2725 = vmatprep.subr.bf16.mxu0 %v2009
        %2726 = vmatpush1.bf16.msra.mxu0 %v2008
        %2727 = vmatprep.subr.bf16.mxu0 %v2015
        %2728 = vmatpush1.bf16.msra.mxu0 %v2014
        %2729 = vmatprep.subr.bf16.mxu0 %v2021
        %2730 = vmatpush1.bf16.msra.mxu0 %v2020
        %2731 = vmatprep.subr.bf16.mxu0 %v2027
        %2732 = vmatpush1.bf16.msra.mxu0 %v2026
        %2733 = vmatprep.subr.bf16.mxu0 %v2033
        %2734 = vmatpush1.bf16.msra.mxu0 %v2032
        %2735 = vmatprep.subr.bf16.mxu0 %v2039
        %2736 = vmatpush1.bf16.msra.mxu0 %v2038
        %2737 = vmatprep.subr.bf16.mxu0 %v2045
        %2738 = vmatpush1.bf16.msra.mxu0 %v2044
        %2739 = vmatprep.subr.bf16.mxu0 %v2051
        %2740 = vmatpush1.bf16.msra.mxu0 %v2050
        %2741 = vmatprep.subr.bf16.mxu0 %v2057
        %2742 = vmatpush1.bf16.msra.mxu0 %v2056
        %2743 = vmatprep.subr.bf16.mxu0 %v2063
        %2744 = vmatpush1.bf16.msra.mxu0 %v2062
        %2745 = vmatprep.subr.bf16.mxu0 %v2069
        %2746 = vmatpush1.bf16.msra.mxu0 %v2068
        %2747 = vmatprep.subr.bf16.mxu0 %v2075
        %2748 = vmatpush1.bf16.msra.mxu0 %v2074
        %2749 = vmatprep.subr.bf16.mxu0 %v2081
        %2750 = vmatpush1.bf16.msra.mxu0 %v2080
        %2751 = vmatprep.subr.bf16.mxu0 %v2087
        %2752 = vmatpush1.bf16.msra.mxu0 %v2086
        %2753 = vmatprep.mubr.bf16.mxu0 %v719
        %2754 = vmatmul.mubr.bf16.gmra.mrb[0].mxu0 %v718
        %v2755 = vpop.f32.mrb[0].mxu0
        %v2756 = vadd.f32 %v2703, %v2755
        %v2757 = vpop.f32.mrb[0].mxu0
        %v2758 = vadd.f32 %v2705, %v2757
        %v2759 = vpop.f32.mrb[0].mxu0
        %v2760 = vadd.f32 %v2707, %v2759
        %v2761 = vpop.f32.mrb[0].mxu0
        %v2762 = vadd.f32 %v2709, %v2761
        %2763 = vmatprep.mubr.bf16.mxu0 %v727
        %2764 = vmatmul.mubr.bf16.gmra.mrb[0].mxu0 %v726
        %v2765 = vpop.f32.mrb[0].mxu0
        %v2766 = vadd.f32 %v2713, %v2765
        %v2767 = vpop.f32.mrb[0].mxu0
        %v2768 = vadd.f32 %v2715, %v2767
        %v2769 = vpop.f32.mrb[0].mxu0
        %v2770 = vadd.f32 %v2717, %v2769
        %v2771 = vpop.f32.mrb[0].mxu0
        %v2772 = vadd.f32 %v2719, %v2771
        %2773 = vdwg.mxu0
        %2774 = vmatprep.subr.bf16.mxu0 %v2093
        %2775 = vmatpush1.bf16.msra.mxu0 %v2092
        %2776 = vmatprep.subr.bf16.mxu0 %v2099
        %2777 = vmatpush1.bf16.msra.mxu0 %v2098
        %2778 = vmatprep.subr.bf16.mxu0 %v2105
        %2779 = vmatpush1.bf16.msra.mxu0 %v2104
        %2780 = vmatprep.subr.bf16.mxu0 %v2111
        %2781 = vmatpush1.bf16.msra.mxu0 %v2110
        %2782 = vmatprep.subr.bf16.mxu0 %v2117
        %2783 = vmatpush1.bf16.msra.mxu0 %v2116
        %2784 = vmatprep.subr.bf16.mxu0 %v2123
        %2785 = vmatpush1.bf16.msra.mxu0 %v2122
        %2786 = vmatprep.subr.bf16.mxu0 %v2129
        %2787 = vmatpush1.bf16.msra.mxu0 %v2128
        %2788 = vmatprep.subr.bf16.mxu0 %v2135
        %2789 = vmatpush1.bf16.msra.mxu0 %v2134
        %2790 = vmatprep.subr.bf16.mxu0 %v2141
        %2791 = vmatpush1.bf16.msra.mxu0 %v2140
        %2792 = vmatprep.subr.bf16.mxu0 %v2147
        %2793 = vmatpush1.bf16.msra.mxu0 %v2146
        %2794 = vmatprep.subr.bf16.mxu0 %v2153
        %2795 = vmatpush1.bf16.msra.mxu0 %v2152
        %2796 = vmatprep.subr.bf16.mxu0 %v2159
        %2797 = vmatpush1.bf16.msra.mxu0 %v2158
        %2798 = vmatprep.subr.bf16.mxu0 %v2165
        %2799 = vmatpush1.bf16.msra.mxu0 %v2164
        %2800 = vmatprep.subr.bf16.mxu0 %v2171
        %2801 = vmatpush1.bf16.msra.mxu0 %v2170
        %2802 = vmatprep.subr.bf16.mxu0 %v2177
        %2803 = vmatpush1.bf16.msra.mxu0 %v2176
        %2804 = vmatprep.subr.bf16.mxu0 %v2183
        %2805 = vmatpush1.bf16.msra.mxu0 %v2182
        %2806 = vmatprep.mubr.bf16.mxu0 %v721
        %2807 = vmatmul.mubr.bf16.gmra.mrb[0].mxu0 %v720
        %v2808 = vpop.f32.mrb[0].mxu0
        %v2809 = vadd.f32 %v2756, %v2808
        %v2810 = vpop.f32.mrb[0].mxu0
        %v2811 = vadd.f32 %v2758, %v2810
        %v2812 = vpop.f32.mrb[0].mxu0
        %v2813 = vadd.f32 %v2760, %v2812
        %v2814 = vpop.f32.mrb[0].mxu0
        %v2815 = vadd.f32 %v2762, %v2814
        %2816 = vmatprep.mubr.bf16.mxu0 %v729
        %2817 = vmatmul.mubr.bf16.gmra.mrb[0].mxu0 %v728
        %v2818 = vpop.f32.mrb[0].mxu0
        %v2819 = vadd.f32 %v2766, %v2818
        %v2820 = vpop.f32.mrb[0].mxu0
        %v2821 = vadd.f32 %v2768, %v2820
        %v2822 = vpop.f32.mrb[0].mxu0
        %v2823 = vadd.f32 %v2770, %v2822
        %v2824 = vpop.f32.mrb[0].mxu0
        %v2825 = vadd.f32 %v2772, %v2824
        %2826 = vdwg.mxu0
        %2827 = vmatprep.subr.bf16.mxu0 %v2189
        %2828 = vmatpush1.bf16.msra.mxu0 %v2188
        %2829 = vmatprep.subr.bf16.mxu0 %v2195
        %2830 = vmatpush1.bf16.msra.mxu0 %v2194
        %2831 = vmatprep.subr.bf16.mxu0 %v2201
        %2832 = vmatpush1.bf16.msra.mxu0 %v2200
        %2833 = vmatprep.subr.bf16.mxu0 %v2207
        %2834 = vmatpush1.bf16.msra.mxu0 %v2206
        %2835 = vmatprep.subr.bf16.mxu0 %v2213
        %2836 = vmatpush1.bf16.msra.mxu0 %v2212
        %2837 = vmatprep.subr.bf16.mxu0 %v2219
        %2838 = vmatpush1.bf16.msra.mxu0 %v2218
        %2839 = vmatprep.subr.bf16.mxu0 %v2225
        %2840 = vmatpush1.bf16.msra.mxu0 %v2224
        %2841 = vmatprep.subr.bf16.mxu0 %v2231
        %2842 = vmatpush1.bf16.msra.mxu0 %v2230
        %2843 = vmatprep.subr.bf16.mxu0 %v2237
        %2844 = vmatpush1.bf16.msra.mxu0 %v2236
        %2845 = vmatprep.subr.bf16.mxu0 %v2243
        %2846 = vmatpush1.bf16.msra.mxu0 %v2242
        %2847 = vmatprep.subr.bf16.mxu0 %v2249
        %2848 = vmatpush1.bf16.msra.mxu0 %v2248
        %2849 = vmatprep.subr.bf16.mxu0 %v2255
        %2850 = vmatpush1.bf16.msra.mxu0 %v2254
        %2851 = vmatprep.subr.bf16.mxu0 %v2261
        %2852 = vmatpush1.bf16.msra.mxu0 %v2260
        %2853 = vmatprep.subr.bf16.mxu0 %v2267
        %2854 = vmatpush1.bf16.msra.mxu0 %v2266
        %2855 = vmatprep.subr.bf16.mxu0 %v2273
        %2856 = vmatpush1.bf16.msra.mxu0 %v2272
        %2857 = vmatprep.subr.bf16.mxu0 %v2279
        %2858 = vmatpush1.bf16.msra.mxu0 %v2278
        %2859 = vmatprep.mubr.bf16.mxu0 %v723
        %2860 = vmatmul.mubr.bf16.gmra.mrb[0].mxu0 %v722
        %v2861 = vpop.f32.mrb[0].mxu0
        %v2862 = vadd.f32 %v2809, %v2861
        %v2863 = vpop.f32.mrb[0].mxu0
        %v2864 = vadd.f32 %v2811, %v2863
        %v2865 = vpop.f32.mrb[0].mxu0
        %v2866 = vadd.f32 %v2813, %v2865
        %v2867 = vpop.f32.mrb[0].mxu0
        %v2868 = vadd.f32 %v2815, %v2867
        %2869 = vmatprep.mubr.bf16.mxu0 %v731
        %2870 = vmatmul.mubr.bf16.gmra.mrb[0].mxu0 %v730
        %v2871 = vpop.f32.mrb[0].mxu0
        %v2872 = vadd.f32 %v2819, %v2871
        %v2873 = vpop.f32.mrb[0].mxu0
        %v2874 = vadd.f32 %v2821, %v2873
        %v2875 = vpop.f32.mrb[0].mxu0
        %v2876 = vadd.f32 %v2823, %v2875
        %v2877 = vpop.f32.mrb[0].mxu0
        %v2878 = vadd.f32 %v2825, %v2877
        %2879 = vdwg.mxu0
        %2880 = vmatprep.subr.bf16.mxu0 %v1903
        %2881 = vmatpush1.bf16.msra.mxu0 %v1902
        %2882 = vmatprep.subr.bf16.mxu0 %v1909
        %2883 = vmatpush1.bf16.msra.mxu0 %v1908
        %2884 = vmatprep.subr.bf16.mxu0 %v1915
        %2885 = vmatpush1.bf16.msra.mxu0 %v1914
        %2886 = vmatprep.subr.bf16.mxu0 %v1921
        %2887 = vmatpush1.bf16.msra.mxu0 %v1920
        %2888 = vmatprep.subr.bf16.mxu0 %v1927
        %2889 = vmatpush1.bf16.msra.mxu0 %v1926
        %2890 = vmatprep.subr.bf16.mxu0 %v1933
        %2891 = vmatpush1.bf16.msra.mxu0 %v1932
        %2892 = vmatprep.subr.bf16.mxu0 %v1939
        %2893 = vmatpush1.bf16.msra.mxu0 %v1938
        %2894 = vmatprep.subr.bf16.mxu0 %v1945
        %2895 = vmatpush1.bf16.msra.mxu0 %v1944
        %2896 = vmatprep.subr.bf16.mxu0 %v1951
        %2897 = vmatpush1.bf16.msra.mxu0 %v1950
        %2898 = vmatprep.subr.bf16.mxu0 %v1957
        %2899 = vmatpush1.bf16.msra.mxu0 %v1956
        %2900 = vmatprep.subr.bf16.mxu0 %v1963
        %2901 = vmatpush1.bf16.msra.mxu0 %v1962
        %2902 = vmatprep.subr.bf16.mxu0 %v1969
        %2903 = vmatpush1.bf16.msra.mxu0 %v1968
        %2904 = vmatprep.subr.bf16.mxu0 %v1975
        %2905 = vmatpush1.bf16.msra.mxu0 %v1974
        %2906 = vmatprep.subr.bf16.mxu0 %v1981
        %2907 = vmatpush1.bf16.msra.mxu0 %v1980
        %2908 = vmatprep.subr.bf16.mxu0 %v1987
        %2909 = vmatpush1.bf16.msra.mxu0 %v1986
        %2910 = vmatprep.subr.bf16.mxu0 %v1993
        %2911 = vmatpush1.bf16.msra.mxu0 %v1992
        %2912 = vmatprep.mubr.bf16.mxu0 %v717
        %2913 = vmatmul.mubr.bf16.gmra.mrb[0].mxu0 %v716
        %v2914 = vpop.f32.mrb[0].mxu0
        %v2915 = vadd.f32 %v649, %v2914
        %v2916 = vpop.f32.mrb[0].mxu0
        %v2917 = vadd.f32 %v653, %v2916
        %v2918 = vpop.f32.mrb[0].mxu0
        %v2919 = vadd.f32 %v649, %v2918
        %v2920 = vpop.f32.mrb[0].mxu0
        %v2921 = vadd.f32 %v653, %v2920
        %2922 = vmatprep.mubr.bf16.mxu0 %v725
        %2923 = vmatmul.mubr.bf16.gmra.mrb[0].mxu0 %v724
        %v2924 = vpop.f32.mrb[0].mxu0
        %v2925 = vadd.f32 %v649, %v2924
        %v2926 = vpop.f32.mrb[0].mxu0
        %v2927 = vadd.f32 %v653, %v2926
        %v2928 = vpop.f32.mrb[0].mxu0
        %v2929 = vadd.f32 %v649, %v2928
        %v2930 = vpop.f32.mrb[0].mxu0
        %v2931 = vadd.f32 %v653, %v2930
        %2932 = vdwg.mxu0
        %2933 = vmatprep.subr.bf16.mxu0 %v1999
        %2934 = vmatpush1.bf16.msra.mxu0 %v1998
        %2935 = vmatprep.subr.bf16.mxu0 %v2005
        %2936 = vmatpush1.bf16.msra.mxu0 %v2004
        %2937 = vmatprep.subr.bf16.mxu0 %v2011
        %2938 = vmatpush1.bf16.msra.mxu0 %v2010
        %2939 = vmatprep.subr.bf16.mxu0 %v2017
        %2940 = vmatpush1.bf16.msra.mxu0 %v2016
        %2941 = vmatprep.subr.bf16.mxu0 %v2023
        %2942 = vmatpush1.bf16.msra.mxu0 %v2022
        %2943 = vmatprep.subr.bf16.mxu0 %v2029
        %2944 = vmatpush1.bf16.msra.mxu0 %v2028
        %2945 = vmatprep.subr.bf16.mxu0 %v2035
        %2946 = vmatpush1.bf16.msra.mxu0 %v2034
        %2947 = vmatprep.subr.bf16.mxu0 %v2041
        %2948 = vmatpush1.bf16.msra.mxu0 %v2040
        %2949 = vmatprep.subr.bf16.mxu0 %v2047
        %2950 = vmatpush1.bf16.msra.mxu0 %v2046
        %2951 = vmatprep.subr.bf16.mxu0 %v2053
        %2952 = vmatpush1.bf16.msra.mxu0 %v2052
        %2953 = vmatprep.subr.bf16.mxu0 %v2059
        %2954 = vmatpush1.bf16.msra.mxu0 %v2058
        %2955 = vmatprep.subr.bf16.mxu0 %v2065
        %2956 = vmatpush1.bf16.msra.mxu0 %v2064
        %2957 = vmatprep.subr.bf16.mxu0 %v2071
        %2958 = vmatpush1.bf16.msra.mxu0 %v2070
        %2959 = vmatprep.subr.bf16.mxu0 %v2077
        %2960 = vmatpush1.bf16.msra.mxu0 %v2076
        %2961 = vmatprep.subr.bf16.mxu0 %v2083
        %2962 = vmatpush1.bf16.msra.mxu0 %v2082
        %2963 = vmatprep.subr.bf16.mxu0 %v2089
        %2964 = vmatpush1.bf16.msra.mxu0 %v2088
        %2965 = vmatprep.mubr.bf16.mxu0 %v719
        %2966 = vmatmul.mubr.bf16.gmra.mrb[0].mxu0 %v718
        %v2967 = vpop.f32.mrb[0].mxu0
        %v2968 = vadd.f32 %v2915, %v2967
        %v2969 = vpop.f32.mrb[0].mxu0
        %v2970 = vadd.f32 %v2917, %v2969
        %v2971 = vpop.f32.mrb[0].mxu0
        %v2972 = vadd.f32 %v2919, %v2971
        %v2973 = vpop.f32.mrb[0].mxu0
        %v2974 = vadd.f32 %v2921, %v2973
        %2975 = vmatprep.mubr.bf16.mxu0 %v727
        %2976 = vmatmul.mubr.bf16.gmra.mrb[0].mxu0 %v726
        %v2977 = vpop.f32.mrb[0].mxu0
        %v2978 = vadd.f32 %v2925, %v2977
        %v2979 = vpop.f32.mrb[0].mxu0
        %v2980 = vadd.f32 %v2927, %v2979
        %v2981 = vpop.f32.mrb[0].mxu0
        %v2982 = vadd.f32 %v2929, %v2981
        %v2983 = vpop.f32.mrb[0].mxu0
        %v2984 = vadd.f32 %v2931, %v2983
        %2985 = vdwg.mxu0
        %2986 = vmatprep.subr.bf16.mxu0 %v2095
        %2987 = vmatpush1.bf16.msra.mxu0 %v2094
        %2988 = vmatprep.subr.bf16.mxu0 %v2101
        %2989 = vmatpush1.bf16.msra.mxu0 %v2100
        %2990 = vmatprep.subr.bf16.mxu0 %v2107
        %2991 = vmatpush1.bf16.msra.mxu0 %v2106
        %2992 = vmatprep.subr.bf16.mxu0 %v2113
        %2993 = vmatpush1.bf16.msra.mxu0 %v2112
        %2994 = vmatprep.subr.bf16.mxu0 %v2119
        %2995 = vmatpush1.bf16.msra.mxu0 %v2118
        %2996 = vmatprep.subr.bf16.mxu0 %v2125
        %2997 = vmatpush1.bf16.msra.mxu0 %v2124
        %2998 = vmatprep.subr.bf16.mxu0 %v2131
        %2999 = vmatpush1.bf16.msra.mxu0 %v2130
        %3000 = vmatprep.subr.bf16.mxu0 %v2137
        %3001 = vmatpush1.bf16.msra.mxu0 %v2136
        %3002 = vmatprep.subr.bf16.mxu0 %v2143
        %3003 = vmatpush1.bf16.msra.mxu0 %v2142
        %3004 = vmatprep.subr.bf16.mxu0 %v2149
        %3005 = vmatpush1.bf16.msra.mxu0 %v2148
        %3006 = vmatprep.subr.bf16.mxu0 %v2155
        %3007 = vmatpush1.bf16.msra.mxu0 %v2154
        %3008 = vmatprep.subr.bf16.mxu0 %v2161
        %3009 = vmatpush1.bf16.msra.mxu0 %v2160
        %3010 = vmatprep.subr.bf16.mxu0 %v2167
        %3011 = vmatpush1.bf16.msra.mxu0 %v2166
        %3012 = vmatprep.subr.bf16.mxu0 %v2173
        %3013 = vmatpush1.bf16.msra.mxu0 %v2172
        %3014 = vmatprep.subr.bf16.mxu0 %v2179
        %3015 = vmatpush1.bf16.msra.mxu0 %v2178
        %3016 = vmatprep.subr.bf16.mxu0 %v2185
        %3017 = vmatpush1.bf16.msra.mxu0 %v2184
        %3018 = vmatprep.mubr.bf16.mxu0 %v721
        %3019 = vmatmul.mubr.bf16.gmra.mrb[0].mxu0 %v720
        %v3020 = vpop.f32.mrb[0].mxu0
        %v3021 = vadd.f32 %v2968, %v3020
        %v3022 = vpop.f32.mrb[0].mxu0
        %v3023 = vadd.f32 %v2970, %v3022
        %v3024 = vpop.f32.mrb[0].mxu0
        %v3025 = vadd.f32 %v2972, %v3024
        %v3026 = vpop.f32.mrb[0].mxu0
        %v3027 = vadd.f32 %v2974, %v3026
        %3028 = vmatprep.mubr.bf16.mxu0 %v729
        %3029 = vmatmul.mubr.bf16.gmra.mrb[0].mxu0 %v728
        %v3030 = vpop.f32.mrb[0].mxu0
        %v3031 = vadd.f32 %v2978, %v3030
        %v3032 = vpop.f32.mrb[0].mxu0
        %v3033 = vadd.f32 %v2980, %v3032
        %v3034 = vpop.f32.mrb[0].mxu0
        %v3035 = vadd.f32 %v2982, %v3034
        %v3036 = vpop.f32.mrb[0].mxu0
        %v3037 = vadd.f32 %v2984, %v3036
        %3038 = vdwg.mxu0
        %3039 = vmatprep.subr.bf16.mxu0 %v2191
        %3040 = vmatpush1.bf16.msra.mxu0 %v2190
        %3041 = vmatprep.subr.bf16.mxu0 %v2197
        %3042 = vmatpush1.bf16.msra.mxu0 %v2196
        %3043 = vmatprep.subr.bf16.mxu0 %v2203
        %3044 = vmatpush1.bf16.msra.mxu0 %v2202
        %3045 = vmatprep.subr.bf16.mxu0 %v2209
        %3046 = vmatpush1.bf16.msra.mxu0 %v2208
        %3047 = vmatprep.subr.bf16.mxu0 %v2215
        %3048 = vmatpush1.bf16.msra.mxu0 %v2214
        %3049 = vmatprep.subr.bf16.mxu0 %v2221
        %3050 = vmatpush1.bf16.msra.mxu0 %v2220
        %3051 = vmatprep.subr.bf16.mxu0 %v2227
        %3052 = vmatpush1.bf16.msra.mxu0 %v2226
        %3053 = vmatprep.subr.bf16.mxu0 %v2233
        %3054 = vmatpush1.bf16.msra.mxu0 %v2232
        %3055 = vmatprep.subr.bf16.mxu0 %v2239
        %3056 = vmatpush1.bf16.msra.mxu0 %v2238
        %3057 = vmatprep.subr.bf16.mxu0 %v2245
        %3058 = vmatpush1.bf16.msra.mxu0 %v2244
        %3059 = vmatprep.subr.bf16.mxu0 %v2251
        %3060 = vmatpush1.bf16.msra.mxu0 %v2250
        %3061 = vmatprep.subr.bf16.mxu0 %v2257
        %3062 = vmatpush1.bf16.msra.mxu0 %v2256
        %3063 = vmatprep.subr.bf16.mxu0 %v2263
        %3064 = vmatpush1.bf16.msra.mxu0 %v2262
        %3065 = vmatprep.subr.bf16.mxu0 %v2269
        %3066 = vmatpush1.bf16.msra.mxu0 %v2268
        %3067 = vmatprep.subr.bf16.mxu0 %v2275
        %3068 = vmatpush1.bf16.msra.mxu0 %v2274
        %3069 = vmatprep.subr.bf16.mxu0 %v2281
        %3070 = vmatpush1.bf16.msra.mxu0 %v2280
        %3071 = vmatprep.mubr.bf16.mxu0 %v723
        %3072 = vmatmul.mubr.bf16.gmra.mrb[0].mxu0 %v722
        %v3073 = vpop.f32.mrb[0].mxu0
        %v3074 = vadd.f32 %v3021, %v3073
        %v3075 = vpop.f32.mrb[0].mxu0
        %v3076 = vadd.f32 %v3023, %v3075
        %v3077 = vpop.f32.mrb[0].mxu0
        %v3078 = vadd.f32 %v3025, %v3077
        %v3079 = vpop.f32.mrb[0].mxu0
        %v3080 = vadd.f32 %v3027, %v3079
        %3081 = vmatprep.mubr.bf16.mxu0 %v731
        %3082 = vmatmul.mubr.bf16.gmra.mrb[0].mxu0 %v730
        %v3083 = vpop.f32.mrb[0].mxu0
        %v3084 = vadd.f32 %v3031, %v3083
        %v3085 = vpop.f32.mrb[0].mxu0
        %v3086 = vadd.f32 %v3033, %v3085
        %v3087 = vpop.f32.mrb[0].mxu0
        %v3088 = vadd.f32 %v3035, %v3087
        %v3089 = vpop.f32.mrb[0].mxu0
        %v3090 = vadd.f32 %v3037, %v3089
        %3091 = vdwg.mxu0
        %3092 = vmatprep.subr.bf16.mxu0 %v1905
        %3093 = vmatpush1.bf16.msra.mxu0 %v1904
        %3094 = vmatprep.subr.bf16.mxu0 %v1911
        %3095 = vmatpush1.bf16.msra.mxu0 %v1910
        %3096 = vmatprep.subr.bf16.mxu0 %v1917
        %3097 = vmatpush1.bf16.msra.mxu0 %v1916
        %3098 = vmatprep.subr.bf16.mxu0 %v1923
        %3099 = vmatpush1.bf16.msra.mxu0 %v1922
        %3100 = vmatprep.subr.bf16.mxu0 %v1929
        %3101 = vmatpush1.bf16.msra.mxu0 %v1928
        %3102 = vmatprep.subr.bf16.mxu0 %v1935
        %3103 = vmatpush1.bf16.msra.mxu0 %v1934
        %3104 = vmatprep.subr.bf16.mxu0 %v1941
        %3105 = vmatpush1.bf16.msra.mxu0 %v1940
        %3106 = vmatprep.subr.bf16.mxu0 %v1947
        %3107 = vmatpush1.bf16.msra.mxu0 %v1946
        %3108 = vmatprep.subr.bf16.mxu0 %v1953
        %3109 = vmatpush1.bf16.msra.mxu0 %v1952
        %3110 = vmatprep.subr.bf16.mxu0 %v1959
        %3111 = vmatpush1.bf16.msra.mxu0 %v1958
        %3112 = vmatprep.subr.bf16.mxu0 %v1965
        %3113 = vmatpush1.bf16.msra.mxu0 %v1964
        %3114 = vmatprep.subr.bf16.mxu0 %v1971
        %3115 = vmatpush1.bf16.msra.mxu0 %v1970
        %3116 = vmatprep.subr.bf16.mxu0 %v1977
        %3117 = vmatpush1.bf16.msra.mxu0 %v1976
        %3118 = vmatprep.subr.bf16.mxu0 %v1983
        %3119 = vmatpush1.bf16.msra.mxu0 %v1982
        %3120 = vmatprep.subr.bf16.mxu0 %v1989
        %3121 = vmatpush1.bf16.msra.mxu0 %v1988
        %3122 = vmatprep.subr.bf16.mxu0 %v1995
        %3123 = vmatpush1.bf16.msra.mxu0 %v1994
        %3124 = vmatprep.mubr.bf16.mxu0 %v717
        %3125 = vmatmul.mubr.bf16.gmra.mrb[0].mxu0 %v716
        %v3126 = vpop.f32.mrb[0].mxu0
        %v3127 = vadd.f32 %v657, %v3126
        %v3128 = vpop.f32.mrb[0].mxu0
        %v3129 = vadd.f32 %v661, %v3128
        %v3130 = vpop.f32.mrb[0].mxu0
        %v3131 = vadd.f32 %v657, %v3130
        %v3132 = vpop.f32.mrb[0].mxu0
        %v3133 = vadd.f32 %v661, %v3132
        %3134 = vmatprep.mubr.bf16.mxu0 %v725
        %3135 = vmatmul.mubr.bf16.gmra.mrb[0].mxu0 %v724
        %v3136 = vpop.f32.mrb[0].mxu0
        %v3137 = vadd.f32 %v657, %v3136
        %v3138 = vpop.f32.mrb[0].mxu0
        %v3139 = vadd.f32 %v661, %v3138
        %v3140 = vpop.f32.mrb[0].mxu0
        %v3141 = vadd.f32 %v657, %v3140
        %v3142 = vpop.f32.mrb[0].mxu0
        %v3143 = vadd.f32 %v661, %v3142
        %3144 = vdwg.mxu0
        %3145 = vmatprep.subr.bf16.mxu0 %v2001
        %3146 = vmatpush1.bf16.msra.mxu0 %v2000
        %3147 = vmatprep.subr.bf16.mxu0 %v2007
        %3148 = vmatpush1.bf16.msra.mxu0 %v2006
        %3149 = vmatprep.subr.bf16.mxu0 %v2013
        %3150 = vmatpush1.bf16.msra.mxu0 %v2012
        %3151 = vmatprep.subr.bf16.mxu0 %v2019
        %3152 = vmatpush1.bf16.msra.mxu0 %v2018
        %3153 = vmatprep.subr.bf16.mxu0 %v2025
        %3154 = vmatpush1.bf16.msra.mxu0 %v2024
        %3155 = vmatprep.subr.bf16.mxu0 %v2031
        %3156 = vmatpush1.bf16.msra.mxu0 %v2030
        %3157 = vmatprep.subr.bf16.mxu0 %v2037
        %3158 = vmatpush1.bf16.msra.mxu0 %v2036
        %3159 = vmatprep.subr.bf16.mxu0 %v2043
        %3160 = vmatpush1.bf16.msra.mxu0 %v2042
        %3161 = vmatprep.subr.bf16.mxu0 %v2049
        %3162 = vmatpush1.bf16.msra.mxu0 %v2048
        %3163 = vmatprep.subr.bf16.mxu0 %v2055
        %3164 = vmatpush1.bf16.msra.mxu0 %v2054
        %3165 = vmatprep.subr.bf16.mxu0 %v2061
        %3166 = vmatpush1.bf16.msra.mxu0 %v2060
        %3167 = vmatprep.subr.bf16.mxu0 %v2067
        %3168 = vmatpush1.bf16.msra.mxu0 %v2066
        %3169 = vmatprep.subr.bf16.mxu0 %v2073
        %3170 = vmatpush1.bf16.msra.mxu0 %v2072
        %3171 = vmatprep.subr.bf16.mxu0 %v2079
        %3172 = vmatpush1.bf16.msra.mxu0 %v2078
        %3173 = vmatprep.subr.bf16.mxu0 %v2085
        %3174 = vmatpush1.bf16.msra.mxu0 %v2084
        %3175 = vmatprep.subr.bf16.mxu0 %v2091
        %3176 = vmatpush1.bf16.msra.mxu0 %v2090
        %3177 = vmatprep.mubr.bf16.mxu0 %v719
        %3178 = vmatmul.mubr.bf16.gmra.mrb[0].mxu0 %v718
        %v3179 = vpop.f32.mrb[0].mxu0
        %v3180 = vadd.f32 %v3127, %v3179
        %v3181 = vpop.f32.mrb[0].mxu0
        %v3182 = vadd.f32 %v3129, %v3181
        %v3183 = vpop.f32.mrb[0].mxu0
        %v3184 = vadd.f32 %v3131, %v3183
        %v3185 = vpop.f32.mrb[0].mxu0
        %v3186 = vadd.f32 %v3133, %v3185
        %3187 = vmatprep.mubr.bf16.mxu0 %v727
        %3188 = vmatmul.mubr.bf16.gmra.mrb[0].mxu0 %v726
        %v3189 = vpop.f32.mrb[0].mxu0
        %v3190 = vadd.f32 %v3137, %v3189
        %v3191 = vpop.f32.mrb[0].mxu0
        %v3192 = vadd.f32 %v3139, %v3191
        %v3193 = vpop.f32.mrb[0].mxu0
        %v3194 = vadd.f32 %v3141, %v3193
        %v3195 = vpop.f32.mrb[0].mxu0
        %v3196 = vadd.f32 %v3143, %v3195
        %3197 = vdwg.mxu0
        %3198 = vmatprep.subr.bf16.mxu0 %v2097
        %3199 = vmatpush1.bf16.msra.mxu0 %v2096
        %3200 = vmatprep.subr.bf16.mxu0 %v2103
        %3201 = vmatpush1.bf16.msra.mxu0 %v2102
        %3202 = vmatprep.subr.bf16.mxu0 %v2109
        %3203 = vmatpush1.bf16.msra.mxu0 %v2108
        %3204 = vmatprep.subr.bf16.mxu0 %v2115
        %3205 = vmatpush1.bf16.msra.mxu0 %v2114
        %3206 = vmatprep.subr.bf16.mxu0 %v2121
        %3207 = vmatpush1.bf16.msra.mxu0 %v2120
        %3208 = vmatprep.subr.bf16.mxu0 %v2127
        %3209 = vmatpush1.bf16.msra.mxu0 %v2126
        %3210 = vmatprep.subr.bf16.mxu0 %v2133
        %3211 = vmatpush1.bf16.msra.mxu0 %v2132
        %3212 = vmatprep.subr.bf16.mxu0 %v2139
        %3213 = vmatpush1.bf16.msra.mxu0 %v2138
        %3214 = vmatprep.subr.bf16.mxu0 %v2145
        %3215 = vmatpush1.bf16.msra.mxu0 %v2144
        %3216 = vmatprep.subr.bf16.mxu0 %v2151
        %3217 = vmatpush1.bf16.msra.mxu0 %v2150
        %3218 = vmatprep.subr.bf16.mxu0 %v2157
        %3219 = vmatpush1.bf16.msra.mxu0 %v2156
        %3220 = vmatprep.subr.bf16.mxu0 %v2163
        %3221 = vmatpush1.bf16.msra.mxu0 %v2162
        %3222 = vmatprep.subr.bf16.mxu0 %v2169
        %3223 = vmatpush1.bf16.msra.mxu0 %v2168
        %3224 = vmatprep.subr.bf16.mxu0 %v2175
        %3225 = vmatpush1.bf16.msra.mxu0 %v2174
        %3226 = vmatprep.subr.bf16.mxu0 %v2181
        %3227 = vmatpush1.bf16.msra.mxu0 %v2180
        %3228 = vmatprep.subr.bf16.mxu0 %v2187
        %3229 = vmatpush1.bf16.msra.mxu0 %v2186
        %3230 = vmatprep.mubr.bf16.mxu0 %v721
        %3231 = vmatmul.mubr.bf16.gmra.mrb[0].mxu0 %v720
        %v3232 = vpop.f32.mrb[0].mxu0
        %v3233 = vadd.f32 %v3180, %v3232
        %v3234 = vpop.f32.mrb[0].mxu0
        %v3235 = vadd.f32 %v3182, %v3234
        %v3236 = vpop.f32.mrb[0].mxu0
        %v3237 = vadd.f32 %v3184, %v3236
        %v3238 = vpop.f32.mrb[0].mxu0
        %v3239 = vadd.f32 %v3186, %v3238
        %3240 = vmatprep.mubr.bf16.mxu0 %v729
        %3241 = vmatmul.mubr.bf16.gmra.mrb[0].mxu0 %v728
        %v3242 = vpop.f32.mrb[0].mxu0
        %v3243 = vadd.f32 %v3190, %v3242
        %v3244 = vpop.f32.mrb[0].mxu0
        %v3245 = vadd.f32 %v3192, %v3244
        %v3246 = vpop.f32.mrb[0].mxu0
        %v3247 = vadd.f32 %v3194, %v3246
        %v3248 = vpop.f32.mrb[0].mxu0
        %v3249 = vadd.f32 %v3196, %v3248
        %3250 = vdwg.mxu0
        %3251 = vmatprep.subr.bf16.mxu0 %v2193
        %3252 = vmatpush1.bf16.msra.mxu0 %v2192
        %3253 = vmatprep.subr.bf16.mxu0 %v2199
        %3254 = vmatpush1.bf16.msra.mxu0 %v2198
        %3255 = vmatprep.subr.bf16.mxu0 %v2205
        %3256 = vmatpush1.bf16.msra.mxu0 %v2204
        %3257 = vmatprep.subr.bf16.mxu0 %v2211
        %3258 = vmatpush1.bf16.msra.mxu0 %v2210
        %3259 = vmatprep.subr.bf16.mxu0 %v2217
        %3260 = vmatpush1.bf16.msra.mxu0 %v2216
        %3261 = vmatprep.subr.bf16.mxu0 %v2223
        %3262 = vmatpush1.bf16.msra.mxu0 %v2222
        %3263 = vmatprep.subr.bf16.mxu0 %v2229
        %3264 = vmatpush1.bf16.msra.mxu0 %v2228
        %3265 = vmatprep.subr.bf16.mxu0 %v2235
        %3266 = vmatpush1.bf16.msra.mxu0 %v2234
        %3267 = vmatprep.subr.bf16.mxu0 %v2241
        %3268 = vmatpush1.bf16.msra.mxu0 %v2240
        %3269 = vmatprep.subr.bf16.mxu0 %v2247
        %3270 = vmatpush1.bf16.msra.mxu0 %v2246
        %3271 = vmatprep.subr.bf16.mxu0 %v2253
        %3272 = vmatpush1.bf16.msra.mxu0 %v2252
        %3273 = vmatprep.subr.bf16.mxu0 %v2259
        %3274 = vmatpush1.bf16.msra.mxu0 %v2258
        %3275 = vmatprep.subr.bf16.mxu0 %v2265
        %3276 = vmatpush1.bf16.msra.mxu0 %v2264
        %3277 = vmatprep.subr.bf16.mxu0 %v2271
        %3278 = vmatpush1.bf16.msra.mxu0 %v2270
        %3279 = vmatprep.subr.bf16.mxu0 %v2277
        %3280 = vmatpush1.bf16.msra.mxu0 %v2276
        %3281 = vmatprep.subr.bf16.mxu0 %v2283
        %3282 = vmatpush1.bf16.msra.mxu0 %v2282
        %3283 = vmatprep.mubr.bf16.mxu0 %v723
        %3284 = vmatmul.mubr.bf16.gmra.mrb[0].mxu0 %v722
        %v3285 = vpop.f32.mrb[0].mxu0
        %v3286 = vadd.f32 %v3233, %v3285
        %v3287 = vpop.f32.mrb[0].mxu0
        %v3288 = vadd.f32 %v3235, %v3287
        %v3289 = vpop.f32.mrb[0].mxu0
        %v3290 = vadd.f32 %v3237, %v3289
        %v3291 = vpop.f32.mrb[0].mxu0
        %v3292 = vadd.f32 %v3239, %v3291
        %3293 = vmatprep.mubr.bf16.mxu0 %v731
        %3294 = vmatmul.mubr.bf16.gmra.mrb[0].mxu0 %v730
        %v3295 = vpop.f32.mrb[0].mxu0
        %v3296 = vadd.f32 %v3243, %v3295
        %v3297 = vpop.f32.mrb[0].mxu0
        %v3298 = vadd.f32 %v3245, %v3297
        %v3299 = vpop.f32.mrb[0].mxu0
        %v3300 = vadd.f32 %v3247, %v3299
        %v3301 = vpop.f32.mrb[0].mxu0
        %v3302 = vadd.f32 %v3249, %v3301
        %3303 = vdwg.mxu0
        %v3304 = vmul.f32 %v2862, %v2862
        %v3305 = vmul.f32 %v2864, %v2864
        %v3306 = vmul.f32 %v3074, %v3074
        %v3307 = vmul.f32 %v3076, %v3076
        %v3308 = vmul.f32 %v3286, %v3286
        %v3309 = vmul.f32 %v3288, %v3288
        %v3310 = vmul.f32 %v2866, %v2866
        %v3311 = vmul.f32 %v2868, %v2868
        %v3312 = vmul.f32 %v3078, %v3078
        %v3313 = vmul.f32 %v3080, %v3080
        %v3314 = vmul.f32 %v3290, %v3290
        %v3315 = vmul.f32 %v3292, %v3292
        %v3316 = vmul.f32 %v2872, %v2872
        %v3317 = vmul.f32 %v2874, %v2874
        %v3318 = vmul.f32 %v3084, %v3084
        %v3319 = vmul.f32 %v3086, %v3086
        %v3320 = vmul.f32 %v3296, %v3296
        %v3321 = vmul.f32 %v3298, %v3298
        %v3322 = vmul.f32 %v2876, %v2876
        %v3323 = vmul.f32 %v2878, %v2878
        %v3324 = vmul.f32 %v3088, %v3088
        %v3325 = vmul.f32 %v3090, %v3090
        %v3326 = vmul.f32 %v3300, %v3300
        %v3327 = vmul.f32 %v3302, %v3302
        %v3328 = vadd.f32 %v3304, %v3305
        %v3329 = vadd.f32 %v3328, %v3306
        %v3330 = vadd.f32 %v3329, %v3307
        %v3331 = vadd.f32 %v3330, %v3308
        %v3332 = vadd.f32 %v3331, %v3309
        %3333 = vadd.xlane.f32.xlu0 %v3332
        %v3334 = vpop.xlane.xlu0 %3333
        %v3335 = vadd.f32 %v3310, %v3311
        %v3336 = vadd.f32 %v3335, %v3312
        %v3337 = vadd.f32 %v3336, %v3313
        %v3338 = vadd.f32 %v3337, %v3314
        %v3339 = vadd.f32 %v3338, %v3315
        %3340 = vadd.xlane.f32.xlu0 %v3339
        %v3341 = vpop.xlane.xlu0 %3340
        %v3342 = vadd.f32 %v3316, %v3317
        %v3343 = vadd.f32 %v3342, %v3318
        %v3344 = vadd.f32 %v3343, %v3319
        %v3345 = vadd.f32 %v3344, %v3320
        %v3346 = vadd.f32 %v3345, %v3321
        %3347 = vadd.xlane.f32.xlu0 %v3346
        %v3348 = vpop.xlane.xlu0 %3347
        %v3349 = vadd.f32 %v3322, %v3323
        %v3350 = vadd.f32 %v3349, %v3324
        %v3351 = vadd.f32 %v3350, %v3325
        %v3352 = vadd.f32 %v3351, %v3326
        %v3353 = vadd.f32 %v3352, %v3327
        %3354 = vadd.xlane.f32.xlu0 %v3353
        %v3355 = vpop.xlane.xlu0 %3354
        %v3356 = vmax.f32 %v3334, 1e-24
        %v3357 = vmax.f32 %v3341, 1e-24
        %v3358 = vmax.f32 %v3348, 1e-24
        %v3359 = vmax.f32 %v3355, 1e-24
        %v3360 = vrsqrt.pop %v3356
        %v3361 = vrsqrt.pop %v3357
        %v3362 = vrsqrt.pop %v3358
        %v3363 = vrsqrt.pop %v3359
        %v3364 = vmul.f32 %v2862, %v3360
        %v3365 = vmul.f32 %v2864, %v3360
        %v3366 = vmul.f32 %v3074, %v3360
        %v3367 = vmul.f32 %v3076, %v3360
        %v3368 = vmul.f32 %v3286, %v3360
        %v3369 = vmul.f32 %v3288, %v3360
        %v3370 = vmul.f32 %v2866, %v3361
        %v3371 = vmul.f32 %v2868, %v3361
        %v3372 = vmul.f32 %v3078, %v3361
        %v3373 = vmul.f32 %v3080, %v3361
        %v3374 = vmul.f32 %v3290, %v3361
        %v3375 = vmul.f32 %v3292, %v3361
        %v3376 = vmul.f32 %v2872, %v3362
        %v3377 = vmul.f32 %v2874, %v3362
        %v3378 = vmul.f32 %v3084, %v3362
        %v3379 = vmul.f32 %v3086, %v3362
        %v3380 = vmul.f32 %v3296, %v3362
        %v3381 = vmul.f32 %v3298, %v3362
        %v3382 = vmul.f32 %v2876, %v3363
        %v3383 = vmul.f32 %v2878, %v3363
        %v3384 = vmul.f32 %v3088, %v3363
        %v3385 = vmul.f32 %v3090, %v3363
        %v3386 = vmul.f32 %v3300, %v3363
        %v3387 = vmul.f32 %v3302, %v3363
        %3388 = vst [vmem:[%s223] sm:$0xff] %v3364
        %3389 = vst [vmem:[%s223 + $0x8] sm:$0xff] %v3365
        %3390 = vst [vmem:[%s223 + $0x10] sm:$0xff] %v3366
        %3391 = vst [vmem:[%s223 + $0x18] sm:$0xff] %v3367
        %3392 = vst [vmem:[%s223 + $0x20] sm:$0xff] %v3368
        %3393 = vst [vmem:[%s223 + $0x28] sm:$0xff] %v3369
        %3394 = vst [vmem:[%s223 + $0x30] sm:$0xff] %v3370
        %3395 = vst [vmem:[%s223 + $0x38] sm:$0xff] %v3371
        %3396 = vst [vmem:[%s223 + $0x40] sm:$0xff] %v3372
        %3397 = vst [vmem:[%s223 + $0x48] sm:$0xff] %v3373
        %3398 = vst [vmem:[%s223 + $0x50] sm:$0xff] %v3374
        %3399 = vst [vmem:[%s223 + $0x58] sm:$0xff] %v3375
        %3400 = vst [vmem:[%s223 + $0x60] sm:$0xff] %v3376
        %3401 = vst [vmem:[%s223 + $0x68] sm:$0xff] %v3377
        %3402 = vst [vmem:[%s223 + $0x70] sm:$0xff] %v3378
        %3403 = vst [vmem:[%s223 + $0x78] sm:$0xff] %v3379
        %3404 = vst [vmem:[%s223 + $0x80] sm:$0xff] %v3380
        %3405 = vst [vmem:[%s223 + $0x88] sm:$0xff] %v3381
        %3406 = vst [vmem:[%s223 + $0x90] sm:$0xff] %v3382
        %3407 = vst [vmem:[%s223 + $0x98] sm:$0xff] %v3383
        %3408 = vst [vmem:[%s223 + $0xa0] sm:$0xff] %v3384
        %3409 = vst [vmem:[%s223 + $0xa8] sm:$0xff] %v3385
        %3410 = vst [vmem:[%s223 + $0xb0] sm:$0xff] %v3386
        %3411 = vst [vmem:[%s223 + $0xb8] sm:$0xff] %v3387
        %s3412 = sand.u32 %s97, 1
        %s3413 = scalar_lea.sflag [#allocation4], %s3412
        %s3414 = sand.u32 %s97, 1
        %s3415 = smul.addr %s3414, 192
        %s3416 = scalar_lea.vmem [#allocation8], %s3415
        // Predicated region
        $region45: #{tpu_custom_call.1} parent=31 // pred_check
          %p3417 = pneg %p107
        $region46: #{tpu_custom_call.1} parent=31 // pred_check_branch
          %3419 = sbr.rel (%p3417) target = $region48
        $region47: #{tpu_custom_call.1} parent=31 // pred_region
          %s3420 = smul.u32 4, %s21
          %s3421 = ssub.s32 5, %s3420
          %p3422 = scmp.lt.s32.totalorder %s3421, 4
          %s3423 = scalar_select %p3422, %s3421, 4
          %s3424 = smul.u32 128, %s3423
          %s3425 = smul.u32 %s3424, 6
          %s3427 = ssub.s32 3072, %s3425
          %3428 = vsyncadd %s3413, %s3427
          %p3429 = scmp.ne.s32.totalorder 0, %s3425
          %s3430 = smul.addr %s3420, 6
          %s3431 = smul.addr %s3430, 128
          %s3432 = scalar_lea.hbm %s3, %s3431
          %s3433 = smul.u32 48, %s3423
          %s3434 = sshll.u32 %s3416, 4
          %s3435 = int_to_ptr.vmem [resolvable:$true] %s3434
          %s3436 = sshll.u32 %s3433, 4
          %3440 = dma.vmem_to_hbm [thread:$0]  (%p3429), %s3435, %s3436, %s3432, %s3413, 768, 768, 48
        $region48: #{tpu_custom_call.1} parent=31 // pred_fallthru
          _
      $region32: #{tpu_custom_call.1} parent=5 // pred_fallthru
        _
      %p3441 = scmp.le.s32.totalorder 2, %s16
      // Predicated region
      $region49: #{tpu_custom_call.1} parent=5 // pred_check
        %p3442 = pneg %p3441
      $region50: #{tpu_custom_call.1} parent=5 // pred_check_branch
        %3444 = sbr.rel (%p3442) target = $region52
      $region51: #{tpu_custom_call.1} parent=5 // pred_region
        %s3445 = ssub.s32 %s16, 2
        // Predicated region
        $region53: #{tpu_custom_call.1} parent=51 // pred_check
          %p3446 = pneg %p113
        $region54: #{tpu_custom_call.1} parent=51 // pred_check_branch
          %3448 = sbr.rel (%p3446) target = $region56
        $region55: #{tpu_custom_call.1} parent=51 // pred_region
          %s3449 = sand.u32 %s98, 1
          %s3450 = scalar_lea.sflag [#allocation4], %s3449
          %s3451 = sand.u32 %s98, 1
          %s3452 = smul.addr %s3451, 192
          %s3453 = scalar_lea.vmem [#allocation8], %s3452
          %3454 = dma.done %s3450, 3072
        $region56: #{tpu_custom_call.1} parent=51 // pred_fallthru
          _
      $region52: #{tpu_custom_call.1} parent=5 // pred_fallthru
        _
    $region6: #{tpu_custom_call.1} parent=1 // loop_footer
      %s20 = sadd.s32 1, %s16
    $region7: #{tpu_custom_call.1} parent=1 // loop_footer_branch
      %15 = sbr.rel target = $region3
    $region8: #{tpu_custom_call.1} parent=1 // loop_exit
      _
    %3455 = vsyncpa [#allocation3], 1
    %s3456 = scalar_lea.sflag [#allocation3], 1
    %3457 = vsyncpa %s3456, 1
    %3458 = vsyncpa [#allocation6], 1
    %3459 = vsyncpa [#allocation4], 1
    %s3460 = scalar_lea.sflag [#allocation4], 1
    %3461 = vsyncpa %s3460, 1

</llo_original>
